<compile_context>
chip_gen: v7x
topology: tpu7x:2x2x1
jax: 0.10.0
libtpu: 0.0.40
codegen_flags: <defaults>
</compile_context>

<pallas_src>
import jax
import jax.numpy as jnp
from jax.experimental import pallas as pl
from jax.experimental.pallas import tpu as pltpu

EPS = 1e-3  # HiFiC ChannelNorm2D eps


def _make_kernel(C, Hp, Wp, Sp):
    # Tap offsets in flat padded coordinates, di-major / dj-minor
    # (must match the (9C, C) weight-matrix reshape in the wrapper).
    offs = [(di - 1) * Wp + (dj - 1) for di in range(3) for dj in range(3)]

    def shiftread(x, o):
        # result[..., p] = x[..., (p + o) % Sp]  -- static lane shift.
        o = o % Sp
        if o == 0:
            return x
        return jnp.concatenate([x[..., o:], x[..., :o]], axis=-1)

    def kernel(xp_ref, jidx_ref, w1_ref, b1_ref, g1_ref, be1_ref,
               w2_ref, b2_ref, g2_ref, be2_ref, o_ref):
        P1 = xp_ref[0].astype(jnp.float32)          # (C, Sp) reflect-padded input
        jcol = jidx_ref[...]                        # (1, Sp): padded column index
        p = jax.lax.broadcasted_iota(jnp.int32, (1, Sp), 1)

        top = p < Wp                                # padded row 0
        bot = p >= (Hp - 1) * Wp                    # padded row Hp-1
        left = jcol == 0                            # padded col 0
        right = jcol == Wp - 1                      # padded col Wp-1

        def conv3x3(xpad, w_ref, b_ref):
            # im2col: 9 lane-shifted views stacked on sublanes -> one MXU matmul.
            patches = jnp.concatenate([shiftread(xpad, o) for o in offs], axis=0)
            y = jnp.dot(w_ref[...], patches, preferred_element_type=jnp.float32)
            return y + b_ref[...]                   # (C, Sp); valid at interior

        def channel_norm(y, g_ref, be_ref):
            mu = jnp.sum(y, axis=0, keepdims=True) * (1.0 / C)
            d = y - mu
            var = jnp.sum(d * d, axis=0, keepdims=True) * (1.0 / (C - 1))  # unbiased
            return g_ref[...] * d * jax.lax.rsqrt(var + EPS) + be_ref[...]

        def reflect_pad(a):
            # 'a' is valid at interior padded positions; produce a tensor valid at
            # every padded position: column reflection then row reflection, each a
            # pair of lane shifts + selects.
            ac = jnp.where(left, shiftread(a, 2),
                           jnp.where(right, shiftread(a, -2), a))
            return jnp.where(top, shiftread(ac, 2 * Wp),
                             jnp.where(bot, shiftread(ac, -2 * Wp), ac))

        a1 = channel_norm(conv3x3(P1, w1_ref, b1_ref), g1_ref, be1_ref)
        a1 = jnp.maximum(a1, 0.0)                   # F.relu
        P2 = reflect_pad(a1)
        r = channel_norm(conv3x3(P2, w2_ref, b2_ref), g2_ref, be2_ref)
        o_ref[0] = (r + P1).astype(o_ref.dtype)     # residual add (interior valid)

    return kernel


def residual_block(x_nchw, params):
    """x_nchw: (B, C, H, W).  params: (w1_hwio, b1, g1, be1, w2_hwio, b2, g2, be2),
    conv weights in HWIO (3, 3, C, C), vectors of shape (C,)."""
    w1, b1, g1, be1, w2, b2, g2, be2 = params
    B, C, H, W = x_nchw.shape
    assert H >= 2 and W >= 2 and C >= 2
    Hp, Wp = H + 2, W + 2
    S = Hp * Wp
    Sp = ((S + 127) // 128) * 128                   # lane-aligned flat length

    # ReflectionPad2d(1) for conv1 done by XLA; flatten padded spatial onto lanes.
    xpad = jnp.pad(x_nchw, ((0, 0), (0, 0), (1, 1), (1, 1)), mode="reflect")
    xflat = jnp.pad(xpad.reshape(B, C, S), ((0, 0), (0, 0), (0, Sp - S)))

    # Column-index helper for the in-kernel reflection pad (tail marked interior).
    jidx = jnp.pad(jnp.arange(S, dtype=jnp.int32) % Wp, (0, Sp - S),
                   constant_values=1).reshape(1, Sp)

    # HWIO (3,3,Cin,Cout) -> (Cout, 9*Cin), tap-major / ci-minor (matches im2col).
    def w_mat(w):
        return w.reshape(9 * C, C).T

    def col(v):
        return v.reshape(C, 1)

    args = (xflat, jidx, w_mat(w1), col(b1), col(g1), col(be1),
            w_mat(w2), col(b2), col(g2), col(be2))

    def full_spec(a):
        return pl.BlockSpec(a.shape, lambda b, _n=a.ndim: (0,) * _n)

    in_specs = [pl.BlockSpec((1, C, Sp), lambda b: (b, 0, 0))]
    in_specs += [full_spec(a) for a in args[1:]]

    out_flat = pl.pallas_call(
        _make_kernel(C, Hp, Wp, Sp),
        out_shape=jax.ShapeDtypeStruct((B, C, Sp), x_nchw.dtype),
        grid_spec=pltpu.PrefetchScalarGridSpec(
            num_scalar_prefetch=0,
            grid=(B,),
            in_specs=in_specs,
            out_specs=pl.BlockSpec((1, C, Sp), lambda b: (b, 0, 0)),
        ),
        compiler_params=pltpu.CompilerParams(
            dimension_semantics=("parallel",)),
    )(*args)

    # Un-pad: take the interior of the flat padded layout (cheap XLA-side slice).
    return out_flat[:, :, :S].reshape(B, C, Hp, Wp)[:, :, 1:H + 1, 1:W + 1]


def residual_block_ref(x_nchw, params):
    # Pure-JAX reference (NCHW activations, HWIO weights) for validation.
    w1, b1, g1, be1, w2, b2, g2, be2 = params

    def pad(t):
        return jnp.pad(t, ((0, 0), (0, 0), (1, 1), (1, 1)), mode="reflect")

    def conv(t, w, b):
        y = jax.lax.conv_general_dilated(
            t, w, window_strides=(1, 1), padding="VALID",
            dimension_numbers=("NCHW", "HWIO", "NCHW"))
        return y + b[None, :, None, None]

    def cnorm(t, g, be):
        mu = jnp.mean(t, axis=1, keepdims=True)
        var = jnp.var(t, axis=1, keepdims=True, ddof=1)
        return (g[None, :, None, None] * (t - mu) * jax.lax.rsqrt(var + EPS)
                + be[None, :, None, None])

    res = cnorm(conv(pad(x_nchw), w1, b1), g1, be1)
    res = jax.nn.relu(res)
    res = cnorm(conv(pad(res), w2, b2), g2, be2)
    return res + x_nchw


if __name__ == "__main__":
    key = jax.random.PRNGKey(0)
    B, C, H, W = 2, 4, 16, 16                 # PyTorch input_dims = (B, C, H, W)
    keys = jax.random.split(key, 9)

    # Deterministic synthetic params (Conv2d(C,C,3) + ChannelNorm2D shapes).
    fan_in = C * 3 * 3
    scale = 1.0 / (fan_in ** 0.5)
    w1 = jax.random.uniform(keys[1], (3, 3, C, C), jnp.float32, -scale, scale)
    b1 = jax.random.uniform(keys[2], (C,), jnp.float32, -scale, scale)
    w2 = jax.random.uniform(keys[3], (3, 3, C, C), jnp.float32, -scale, scale)
    b2 = jax.random.uniform(keys[4], (C,), jnp.float32, -scale, scale)
    g1 = jax.random.uniform(keys[5], (C,), jnp.float32)   # torch.rand-style init
    be1 = jax.random.uniform(keys[6], (C,), jnp.float32)
    g2 = jax.random.uniform(keys[7], (C,), jnp.float32)
    be2 = jax.random.uniform(keys[8], (C,), jnp.float32)
    params = (w1, b1, g1, be1, w2, b2, g2, be2)

    x_nchw = jax.random.normal(keys[0], (B, C, H, W), jnp.float32)

    out = residual_block(x_nchw, params)
    out = jax.block_until_ready(out)

    ref = residual_block_ref(x_nchw, params)
    err = float(jnp.max(jnp.abs(out - ref)))
    assert jnp.allclose(out, ref, atol=5e-4, rtol=5e-4), f"max abs err {err}"

    print("KERNEL_OK")
</pallas_src>

<mosaic_0001>
module attributes {stable_mosaic.version = 11 : i64} {
  func.func @kernel(%arg0: i32, %arg1: memref<1x4x384xf32, #tpu.memory_space<vmem>>, %arg2: memref<1x384xi32, #tpu.memory_space<vmem>>, %arg3: memref<4x36xf32, #tpu.memory_space<vmem>>, %arg4: memref<4x1xf32, #tpu.memory_space<vmem>>, %arg5: memref<4x1xf32, #tpu.memory_space<vmem>>, %arg6: memref<4x1xf32, #tpu.memory_space<vmem>>, %arg7: memref<4x36xf32, #tpu.memory_space<vmem>>, %arg8: memref<4x1xf32, #tpu.memory_space<vmem>>, %arg9: memref<4x1xf32, #tpu.memory_space<vmem>>, %arg10: memref<4x1xf32, #tpu.memory_space<vmem>>, %arg11: memref<1x4x384xf32, #tpu.memory_space<vmem>>) attributes {dimension_semantics = [#tpu.dimension_semantics<parallel>], iteration_bounds = array<i64: 2>, scalar_prefetch = 0 : i64, scratch_operands = 0 : i64, tpu.core_type = #tpu.core_type<tc>, window_params = [{transform_indices = @transform_0, window_bounds = array<i64: 1, 4, 384>}, {pipeline_mode = #tpu.pipeline_mode<synchronous>, transform_indices = @transform_1, window_bounds = array<i64: 1, 384>}, {pipeline_mode = #tpu.pipeline_mode<synchronous>, transform_indices = @transform_2, window_bounds = array<i64: 4, 36>}, {pipeline_mode = #tpu.pipeline_mode<synchronous>, transform_indices = @transform_3, window_bounds = array<i64: 4, 1>}, {pipeline_mode = #tpu.pipeline_mode<synchronous>, transform_indices = @transform_4, window_bounds = array<i64: 4, 1>}, {pipeline_mode = #tpu.pipeline_mode<synchronous>, transform_indices = @transform_5, window_bounds = array<i64: 4, 1>}, {pipeline_mode = #tpu.pipeline_mode<synchronous>, transform_indices = @transform_6, window_bounds = array<i64: 4, 36>}, {pipeline_mode = #tpu.pipeline_mode<synchronous>, transform_indices = @transform_7, window_bounds = array<i64: 4, 1>}, {pipeline_mode = #tpu.pipeline_mode<synchronous>, transform_indices = @transform_8, window_bounds = array<i64: 4, 1>}, {pipeline_mode = #tpu.pipeline_mode<synchronous>, transform_indices = @transform_9, window_bounds = array<i64: 4, 1>}, {transform_indices = @transform_10, window_bounds = array<i64: 1, 4, 384>}]} {
    %c0 = arith.constant 0 : index
    %c0_0 = arith.constant 0 : index
    %c0_1 = arith.constant 0 : index
    %0 = vector.load %arg1[%c0, %c0_0, %c0_1] : memref<1x4x384xf32, #tpu.memory_space<vmem>>, vector<1x4x384xf32>
    %1 = vector.shape_cast %0 : vector<1x4x384xf32> to vector<4x384xf32>
    %c0_2 = arith.constant 0 : index
    %c0_3 = arith.constant 0 : index
    %2 = vector.load %arg2[%c0_2, %c0_3] : memref<1x384xi32, #tpu.memory_space<vmem>>, vector<1x384xi32>
    %3 = tpu.iota {dimensions = array<i32: 1>} : vector<1x384xi32>
    %c18_i32 = arith.constant 18 : i32
    %4 = vector.broadcast %c18_i32 : i32 to vector<1x384xi32>
    %5 = arith.cmpi slt, %3, %4 : vector<1x384xi32>
    %c306_i32 = arith.constant 306 : i32
    %6 = vector.broadcast %c306_i32 : i32 to vector<1x384xi32>
    %7 = arith.cmpi sge, %3, %6 : vector<1x384xi32>
    %c0_i32 = arith.constant 0 : i32
    %8 = vector.broadcast %c0_i32 : i32 to vector<1x384xi32>
    %9 = arith.cmpi eq, %2, %8 : vector<1x384xi32>
    %c17_i32 = arith.constant 17 : i32
    %10 = vector.broadcast %c17_i32 : i32 to vector<1x384xi32>
    %11 = arith.cmpi eq, %2, %10 : vector<1x384xi32>
    %12 = vector.extract_strided_slice %1 {offsets = [0, 365], sizes = [4, 19], strides = [1, 1]} : vector<4x384xf32> to vector<4x19xf32>
    %13 = vector.extract_strided_slice %1 {offsets = [0, 0], sizes = [4, 365], strides = [1, 1]} : vector<4x384xf32> to vector<4x365xf32>
    %14 = tpu.concatenate %12, %13 in 1 : vector<4x19xf32>, vector<4x365xf32> -> vector<4x384xf32>
    %15 = vector.extract_strided_slice %1 {offsets = [0, 366], sizes = [4, 18], strides = [1, 1]} : vector<4x384xf32> to vector<4x18xf32>
    %16 = vector.extract_strided_slice %1 {offsets = [0, 0], sizes = [4, 366], strides = [1, 1]} : vector<4x384xf32> to vector<4x366xf32>
    %17 = tpu.concatenate %15, %16 in 1 : vector<4x18xf32>, vector<4x366xf32> -> vector<4x384xf32>
    %18 = vector.extract_strided_slice %1 {offsets = [0, 367], sizes = [4, 17], strides = [1, 1]} : vector<4x384xf32> to vector<4x17xf32>
    %19 = vector.extract_strided_slice %1 {offsets = [0, 0], sizes = [4, 367], strides = [1, 1]} : vector<4x384xf32> to vector<4x367xf32>
    %20 = tpu.concatenate %18, %19 in 1 : vector<4x17xf32>, vector<4x367xf32> -> vector<4x384xf32>
    %21 = vector.extract_strided_slice %1 {offsets = [0, 383], sizes = [4, 1], strides = [1, 1]} : vector<4x384xf32> to vector<4x1xf32>
    %22 = vector.extract_strided_slice %1 {offsets = [0, 0], sizes = [4, 383], strides = [1, 1]} : vector<4x384xf32> to vector<4x383xf32>
    %23 = tpu.concatenate %21, %22 in 1 : vector<4x1xf32>, vector<4x383xf32> -> vector<4x384xf32>
    %24 = vector.extract_strided_slice %1 {offsets = [0, 1], sizes = [4, 383], strides = [1, 1]} : vector<4x384xf32> to vector<4x383xf32>
    %25 = vector.extract_strided_slice %1 {offsets = [0, 0], sizes = [4, 1], strides = [1, 1]} : vector<4x384xf32> to vector<4x1xf32>
    %26 = tpu.concatenate %24, %25 in 1 : vector<4x383xf32>, vector<4x1xf32> -> vector<4x384xf32>
    %27 = vector.extract_strided_slice %1 {offsets = [0, 17], sizes = [4, 367], strides = [1, 1]} : vector<4x384xf32> to vector<4x367xf32>
    %28 = vector.extract_strided_slice %1 {offsets = [0, 0], sizes = [4, 17], strides = [1, 1]} : vector<4x384xf32> to vector<4x17xf32>
    %29 = tpu.concatenate %27, %28 in 1 : vector<4x367xf32>, vector<4x17xf32> -> vector<4x384xf32>
    %30 = vector.extract_strided_slice %1 {offsets = [0, 18], sizes = [4, 366], strides = [1, 1]} : vector<4x384xf32> to vector<4x366xf32>
    %31 = vector.extract_strided_slice %1 {offsets = [0, 0], sizes = [4, 18], strides = [1, 1]} : vector<4x384xf32> to vector<4x18xf32>
    %32 = tpu.concatenate %30, %31 in 1 : vector<4x366xf32>, vector<4x18xf32> -> vector<4x384xf32>
    %33 = vector.extract_strided_slice %1 {offsets = [0, 19], sizes = [4, 365], strides = [1, 1]} : vector<4x384xf32> to vector<4x365xf32>
    %34 = vector.extract_strided_slice %1 {offsets = [0, 0], sizes = [4, 19], strides = [1, 1]} : vector<4x384xf32> to vector<4x19xf32>
    %35 = tpu.concatenate %33, %34 in 1 : vector<4x365xf32>, vector<4x19xf32> -> vector<4x384xf32>
    %36 = tpu.concatenate %14, %17, %20, %23, %1, %26, %29, %32, %35 in 0 : vector<4x384xf32>, vector<4x384xf32>, vector<4x384xf32>, vector<4x384xf32>, vector<4x384xf32>, vector<4x384xf32>, vector<4x384xf32>, vector<4x384xf32>, vector<4x384xf32> -> vector<36x384xf32>
    %c0_4 = arith.constant 0 : index
    %c0_5 = arith.constant 0 : index
    %37 = vector.load %arg3[%c0_4, %c0_5] : memref<4x36xf32, #tpu.memory_space<vmem>>, vector<4x36xf32>
    %cst = arith.constant dense<0.000000e+00> : vector<4x384xf32>
    %38 = tpu.matmul %37, %36, %cst {dimension_numbers = #tpu.dot_dimension_numbers<[1], [0], [0], [1], [0, 0, 1, 1], [], []>} : vector<4x36xf32>, vector<36x384xf32>, vector<4x384xf32> -> vector<4x384xf32>
    %c0_6 = arith.constant 0 : index
    %c0_7 = arith.constant 0 : index
    %39 = vector.load %arg4[%c0_6, %c0_7] : memref<4x1xf32, #tpu.memory_space<vmem>>, vector<4x1xf32>
    %40 = vector.broadcast %39 : vector<4x1xf32> to vector<4x384xf32>
    %41 = arith.addf %38, %40 : vector<4x384xf32>
    %cst_8 = arith.constant dense<0.000000e+00> : vector<384xf32>
    %42 = vector.multi_reduction <add>, %41, %cst_8 [0] : vector<4x384xf32> to vector<384xf32>
    %43 = vector.shape_cast %42 : vector<384xf32> to vector<1x384xf32>
    %cst_9 = arith.constant 2.500000e-01 : f32
    %44 = vector.broadcast %cst_9 : f32 to vector<1x384xf32>
    %45 = arith.mulf %43, %44 : vector<1x384xf32>
    %46 = vector.broadcast %45 : vector<1x384xf32> to vector<4x384xf32>
    %47 = arith.subf %41, %46 : vector<4x384xf32>
    %48 = arith.mulf %47, %47 : vector<4x384xf32>
    %cst_10 = arith.constant dense<0.000000e+00> : vector<384xf32>
    %49 = vector.multi_reduction <add>, %48, %cst_10 [0] : vector<4x384xf32> to vector<384xf32>
    %50 = vector.shape_cast %49 : vector<384xf32> to vector<1x384xf32>
    %cst_11 = arith.constant 0.333333343 : f32
    %51 = vector.broadcast %cst_11 : f32 to vector<1x384xf32>
    %52 = arith.mulf %50, %51 : vector<1x384xf32>
    %c0_12 = arith.constant 0 : index
    %c0_13 = arith.constant 0 : index
    %53 = vector.load %arg5[%c0_12, %c0_13] : memref<4x1xf32, #tpu.memory_space<vmem>>, vector<4x1xf32>
    %54 = vector.broadcast %53 : vector<4x1xf32> to vector<4x384xf32>
    %55 = arith.mulf %54, %47 : vector<4x384xf32>
    %cst_14 = arith.constant 1.000000e-03 : f32
    %56 = vector.broadcast %cst_14 : f32 to vector<1x384xf32>
    %57 = arith.addf %52, %56 : vector<1x384xf32>
    %58 = math.rsqrt %57 : vector<1x384xf32>
    %59 = vector.broadcast %58 : vector<1x384xf32> to vector<4x384xf32>
    %60 = arith.mulf %55, %59 : vector<4x384xf32>
    %c0_15 = arith.constant 0 : index
    %c0_16 = arith.constant 0 : index
    %61 = vector.load %arg6[%c0_15, %c0_16] : memref<4x1xf32, #tpu.memory_space<vmem>>, vector<4x1xf32>
    %62 = vector.broadcast %61 : vector<4x1xf32> to vector<4x384xf32>
    %63 = arith.addf %60, %62 : vector<4x384xf32>
    %cst_17 = arith.constant 0.000000e+00 : f32
    %64 = vector.broadcast %cst_17 : f32 to vector<4x384xf32>
    %65 = arith.maximumf %63, %64 : vector<4x384xf32>
    %66 = vector.extract_strided_slice %65 {offsets = [0, 2], sizes = [4, 382], strides = [1, 1]} : vector<4x384xf32> to vector<4x382xf32>
    %67 = vector.extract_strided_slice %65 {offsets = [0, 0], sizes = [4, 2], strides = [1, 1]} : vector<4x384xf32> to vector<4x2xf32>
    %68 = tpu.concatenate %66, %67 in 1 : vector<4x382xf32>, vector<4x2xf32> -> vector<4x384xf32>
    %69 = vector.extract_strided_slice %65 {offsets = [0, 382], sizes = [4, 2], strides = [1, 1]} : vector<4x384xf32> to vector<4x2xf32>
    %70 = vector.extract_strided_slice %65 {offsets = [0, 0], sizes = [4, 382], strides = [1, 1]} : vector<4x384xf32> to vector<4x382xf32>
    %71 = tpu.concatenate %69, %70 in 1 : vector<4x2xf32>, vector<4x382xf32> -> vector<4x384xf32>
    %72 = vector.shape_cast %11 : vector<1x384xi1> to vector<1x384xi1>
    %73 = vector.broadcast %72 : vector<1x384xi1> to vector<4x384xi1>
    %74 = arith.select %73, %71, %65 : vector<4x384xi1>, vector<4x384xf32>
    %75 = vector.shape_cast %9 : vector<1x384xi1> to vector<1x384xi1>
    %76 = vector.broadcast %75 : vector<1x384xi1> to vector<4x384xi1>
    %77 = arith.select %76, %68, %74 : vector<4x384xi1>, vector<4x384xf32>
    %78 = vector.extract_strided_slice %77 {offsets = [0, 36], sizes = [4, 348], strides = [1, 1]} : vector<4x384xf32> to vector<4x348xf32>
    %79 = vector.extract_strided_slice %77 {offsets = [0, 0], sizes = [4, 36], strides = [1, 1]} : vector<4x384xf32> to vector<4x36xf32>
    %80 = tpu.concatenate %78, %79 in 1 : vector<4x348xf32>, vector<4x36xf32> -> vector<4x384xf32>
    %81 = vector.extract_strided_slice %77 {offsets = [0, 348], sizes = [4, 36], strides = [1, 1]} : vector<4x384xf32> to vector<4x36xf32>
    %82 = vector.extract_strided_slice %77 {offsets = [0, 0], sizes = [4, 348], strides = [1, 1]} : vector<4x384xf32> to vector<4x348xf32>
    %83 = tpu.concatenate %81, %82 in 1 : vector<4x36xf32>, vector<4x348xf32> -> vector<4x384xf32>
    %84 = vector.shape_cast %7 : vector<1x384xi1> to vector<1x384xi1>
    %85 = vector.broadcast %84 : vector<1x384xi1> to vector<4x384xi1>
    %86 = arith.select %85, %83, %77 : vector<4x384xi1>, vector<4x384xf32>
    %87 = vector.shape_cast %5 : vector<1x384xi1> to vector<1x384xi1>
    %88 = vector.broadcast %87 : vector<1x384xi1> to vector<4x384xi1>
    %89 = arith.select %88, %80, %86 : vector<4x384xi1>, vector<4x384xf32>
    %90 = vector.extract_strided_slice %89 {offsets = [0, 365], sizes = [4, 19], strides = [1, 1]} : vector<4x384xf32> to vector<4x19xf32>
    %91 = vector.extract_strided_slice %89 {offsets = [0, 0], sizes = [4, 365], strides = [1, 1]} : vector<4x384xf32> to vector<4x365xf32>
    %92 = tpu.concatenate %90, %91 in 1 : vector<4x19xf32>, vector<4x365xf32> -> vector<4x384xf32>
    %93 = vector.extract_strided_slice %89 {offsets = [0, 366], sizes = [4, 18], strides = [1, 1]} : vector<4x384xf32> to vector<4x18xf32>
    %94 = vector.extract_strided_slice %89 {offsets = [0, 0], sizes = [4, 366], strides = [1, 1]} : vector<4x384xf32> to vector<4x366xf32>
    %95 = tpu.concatenate %93, %94 in 1 : vector<4x18xf32>, vector<4x366xf32> -> vector<4x384xf32>
    %96 = vector.extract_strided_slice %89 {offsets = [0, 367], sizes = [4, 17], strides = [1, 1]} : vector<4x384xf32> to vector<4x17xf32>
    %97 = vector.extract_strided_slice %89 {offsets = [0, 0], sizes = [4, 367], strides = [1, 1]} : vector<4x384xf32> to vector<4x367xf32>
    %98 = tpu.concatenate %96, %97 in 1 : vector<4x17xf32>, vector<4x367xf32> -> vector<4x384xf32>
    %99 = vector.extract_strided_slice %89 {offsets = [0, 383], sizes = [4, 1], strides = [1, 1]} : vector<4x384xf32> to vector<4x1xf32>
    %100 = vector.extract_strided_slice %89 {offsets = [0, 0], sizes = [4, 383], strides = [1, 1]} : vector<4x384xf32> to vector<4x383xf32>
    %101 = tpu.concatenate %99, %100 in 1 : vector<4x1xf32>, vector<4x383xf32> -> vector<4x384xf32>
    %102 = vector.extract_strided_slice %89 {offsets = [0, 1], sizes = [4, 383], strides = [1, 1]} : vector<4x384xf32> to vector<4x383xf32>
    %103 = vector.extract_strided_slice %89 {offsets = [0, 0], sizes = [4, 1], strides = [1, 1]} : vector<4x384xf32> to vector<4x1xf32>
    %104 = tpu.concatenate %102, %103 in 1 : vector<4x383xf32>, vector<4x1xf32> -> vector<4x384xf32>
    %105 = vector.extract_strided_slice %89 {offsets = [0, 17], sizes = [4, 367], strides = [1, 1]} : vector<4x384xf32> to vector<4x367xf32>
    %106 = vector.extract_strided_slice %89 {offsets = [0, 0], sizes = [4, 17], strides = [1, 1]} : vector<4x384xf32> to vector<4x17xf32>
    %107 = tpu.concatenate %105, %106 in 1 : vector<4x367xf32>, vector<4x17xf32> -> vector<4x384xf32>
    %108 = vector.extract_strided_slice %89 {offsets = [0, 18], sizes = [4, 366], strides = [1, 1]} : vector<4x384xf32> to vector<4x366xf32>
    %109 = vector.extract_strided_slice %89 {offsets = [0, 0], sizes = [4, 18], strides = [1, 1]} : vector<4x384xf32> to vector<4x18xf32>
    %110 = tpu.concatenate %108, %109 in 1 : vector<4x366xf32>, vector<4x18xf32> -> vector<4x384xf32>
    %111 = vector.extract_strided_slice %89 {offsets = [0, 19], sizes = [4, 365], strides = [1, 1]} : vector<4x384xf32> to vector<4x365xf32>
    %112 = vector.extract_strided_slice %89 {offsets = [0, 0], sizes = [4, 19], strides = [1, 1]} : vector<4x384xf32> to vector<4x19xf32>
    %113 = tpu.concatenate %111, %112 in 1 : vector<4x365xf32>, vector<4x19xf32> -> vector<4x384xf32>
    %114 = tpu.concatenate %92, %95, %98, %101, %89, %104, %107, %110, %113 in 0 : vector<4x384xf32>, vector<4x384xf32>, vector<4x384xf32>, vector<4x384xf32>, vector<4x384xf32>, vector<4x384xf32>, vector<4x384xf32>, vector<4x384xf32>, vector<4x384xf32> -> vector<36x384xf32>
    %c0_18 = arith.constant 0 : index
    %c0_19 = arith.constant 0 : index
    %115 = vector.load %arg7[%c0_18, %c0_19] : memref<4x36xf32, #tpu.memory_space<vmem>>, vector<4x36xf32>
    %cst_20 = arith.constant dense<0.000000e+00> : vector<4x384xf32>
    %116 = tpu.matmul %115, %114, %cst_20 {dimension_numbers = #tpu.dot_dimension_numbers<[1], [0], [0], [1], [0, 0, 1, 1], [], []>} : vector<4x36xf32>, vector<36x384xf32>, vector<4x384xf32> -> vector<4x384xf32>
    %c0_21 = arith.constant 0 : index
    %c0_22 = arith.constant 0 : index
    %117 = vector.load %arg8[%c0_21, %c0_22] : memref<4x1xf32, #tpu.memory_space<vmem>>, vector<4x1xf32>
    %118 = vector.broadcast %117 : vector<4x1xf32> to vector<4x384xf32>
    %119 = arith.addf %116, %118 : vector<4x384xf32>
    %cst_23 = arith.constant dense<0.000000e+00> : vector<384xf32>
    %120 = vector.multi_reduction <add>, %119, %cst_23 [0] : vector<4x384xf32> to vector<384xf32>
    %121 = vector.shape_cast %120 : vector<384xf32> to vector<1x384xf32>
    %cst_24 = arith.constant 2.500000e-01 : f32
    %122 = vector.broadcast %cst_24 : f32 to vector<1x384xf32>
    %123 = arith.mulf %121, %122 : vector<1x384xf32>
    %124 = vector.broadcast %123 : vector<1x384xf32> to vector<4x384xf32>
    %125 = arith.subf %119, %124 : vector<4x384xf32>
    %126 = arith.mulf %125, %125 : vector<4x384xf32>
    %cst_25 = arith.constant dense<0.000000e+00> : vector<384xf32>
    %127 = vector.multi_reduction <add>, %126, %cst_25 [0] : vector<4x384xf32> to vector<384xf32>
    %128 = vector.shape_cast %127 : vector<384xf32> to vector<1x384xf32>
    %cst_26 = arith.constant 0.333333343 : f32
    %129 = vector.broadcast %cst_26 : f32 to vector<1x384xf32>
    %130 = arith.mulf %128, %129 : vector<1x384xf32>
    %c0_27 = arith.constant 0 : index
    %c0_28 = arith.constant 0 : index
    %131 = vector.load %arg9[%c0_27, %c0_28] : memref<4x1xf32, #tpu.memory_space<vmem>>, vector<4x1xf32>
    %132 = vector.broadcast %131 : vector<4x1xf32> to vector<4x384xf32>
    %133 = arith.mulf %132, %125 : vector<4x384xf32>
    %cst_29 = arith.constant 1.000000e-03 : f32
    %134 = vector.broadcast %cst_29 : f32 to vector<1x384xf32>
    %135 = arith.addf %130, %134 : vector<1x384xf32>
    %136 = math.rsqrt %135 : vector<1x384xf32>
    %137 = vector.broadcast %136 : vector<1x384xf32> to vector<4x384xf32>
    %138 = arith.mulf %133, %137 : vector<4x384xf32>
    %c0_30 = arith.constant 0 : index
    %c0_31 = arith.constant 0 : index
    %139 = vector.load %arg10[%c0_30, %c0_31] : memref<4x1xf32, #tpu.memory_space<vmem>>, vector<4x1xf32>
    %140 = vector.broadcast %139 : vector<4x1xf32> to vector<4x384xf32>
    %141 = arith.addf %138, %140 : vector<4x384xf32>
    %142 = arith.addf %141, %1 : vector<4x384xf32>
    %c0_32 = arith.constant 0 : index
    %c0_33 = arith.constant 0 : index
    %c0_34 = arith.constant 0 : index
    %143 = vector.load %arg11[%c0_32, %c0_33, %c0_34] : memref<1x4x384xf32, #tpu.memory_space<vmem>>, vector<1x4x384xf32>
    %144 = vector.shape_cast %143 : vector<1x4x384xf32> to vector<4x384xf32>
    %145 = vector.shape_cast %142 : vector<4x384xf32> to vector<1x4x384xf32>
    tpu.vector_store %arg11[%c0_32, %c0_33, %c0_34], %145 {strides = array<i32>} : memref<1x4x384xf32, #tpu.memory_space<vmem>>, vector<1x4x384xf32>,
    return
  }
  func.func @transform_0(%arg0: i32) -> (i32, i32, i32) {
    %c0_i32 = arith.constant 0 : i32
    %c0_i32_0 = arith.constant 0 : i32
    %c0_i32_1 = arith.constant 0 : i32
    return %arg0, %c0_i32, %c0_i32_0 : i32, i32, i32
  }
  func.func @transform_1(%arg0: i32) -> (i32, i32) {
    %c0_i32 = arith.constant 0 : i32
    %c0_i32_0 = arith.constant 0 : i32
    %c0_i32_1 = arith.constant 0 : i32
    return %c0_i32, %c0_i32_0 : i32, i32
  }
  func.func @transform_2(%arg0: i32) -> (i32, i32) {
    %c0_i32 = arith.constant 0 : i32
    %c0_i32_0 = arith.constant 0 : i32
    %c0_i32_1 = arith.constant 0 : i32
    return %c0_i32, %c0_i32_0 : i32, i32
  }
  func.func @transform_3(%arg0: i32) -> (i32, i32) {
    %c0_i32 = arith.constant 0 : i32
    %c0_i32_0 = arith.constant 0 : i32
    %c0_i32_1 = arith.constant 0 : i32
    return %c0_i32, %c0_i32_0 : i32, i32
  }
  func.func @transform_4(%arg0: i32) -> (i32, i32) {
    %c0_i32 = arith.constant 0 : i32
    %c0_i32_0 = arith.constant 0 : i32
    %c0_i32_1 = arith.constant 0 : i32
    return %c0_i32, %c0_i32_0 : i32, i32
  }
  func.func @transform_5(%arg0: i32) -> (i32, i32) {
    %c0_i32 = arith.constant 0 : i32
    %c0_i32_0 = arith.constant 0 : i32
    %c0_i32_1 = arith.constant 0 : i32
    return %c0_i32, %c0_i32_0 : i32, i32
  }
  func.func @transform_6(%arg0: i32) -> (i32, i32) {
    %c0_i32 = arith.constant 0 : i32
    %c0_i32_0 = arith.constant 0 : i32
    %c0_i32_1 = arith.constant 0 : i32
    return %c0_i32, %c0_i32_0 : i32, i32
  }
  func.func @transform_7(%arg0: i32) -> (i32, i32) {
    %c0_i32 = arith.constant 0 : i32
    %c0_i32_0 = arith.constant 0 : i32
    %c0_i32_1 = arith.constant 0 : i32
    return %c0_i32, %c0_i32_0 : i32, i32
  }
  func.func @transform_8(%arg0: i32) -> (i32, i32) {
    %c0_i32 = arith.constant 0 : i32
    %c0_i32_0 = arith.constant 0 : i32
    %c0_i32_1 = arith.constant 0 : i32
    return %c0_i32, %c0_i32_0 : i32, i32
  }
  func.func @transform_9(%arg0: i32) -> (i32, i32) {
    %c0_i32 = arith.constant 0 : i32
    %c0_i32_0 = arith.constant 0 : i32
    %c0_i32_1 = arith.constant 0 : i32
    return %c0_i32, %c0_i32_0 : i32, i32
  }
  func.func @transform_10(%arg0: i32) -> (i32, i32, i32) {
    %c0_i32 = arith.constant 0 : i32
    %c0_i32_0 = arith.constant 0 : i32
    %c0_i32_1 = arith.constant 0 : i32
    return %arg0, %c0_i32, %c0_i32_0 : i32, i32, i32
  }
}

</mosaic_0001>

<llo_original>
// kernel: tpu_custom_call.1
$region0: #{tpu_custom_call.1}
  #allocation0 [shape = 'u32[]', space=smem, size = 0x4, offset = 0x4, fixed_abs, tag = 'smem constant byte address 0x4 - core index']
  #allocation1 [shape = 'u32[144,128]{1,0:T(1,128)}', space=vmem, size = 0x12000, scoped, tag = 'internal scratch']
  %s0 = inlined_call_operand.vmem [shape: f32[2,4,384], index: 0, kind: input, shape index: {}]
  %s1 = inlined_call_operand.hbm [shape: s32[1,384], index: 1, kind: input, shape index: {}]
  %s2 = inlined_call_operand.vmem [shape: f32[4,36], index: 2, kind: input, shape index: {}]
  %s3 = inlined_call_operand.vmem [shape: f32[4,1], index: 3, kind: input, shape index: {}]
  %s4 = inlined_call_operand.vmem [shape: f32[4,1], index: 4, kind: input, shape index: {}]
  %s5 = inlined_call_operand.vmem [shape: f32[4,1], index: 5, kind: input, shape index: {}]
  %s6 = inlined_call_operand.vmem [shape: f32[4,36], index: 6, kind: input, shape index: {}]
  %s7 = inlined_call_operand.vmem [shape: f32[4,1], index: 7, kind: input, shape index: {}]
  %s8 = inlined_call_operand.vmem [shape: f32[4,1], index: 8, kind: input, shape index: {}]
  %s9 = inlined_call_operand.vmem [shape: f32[4,1], index: 9, kind: input, shape index: {}]
  %s10 = inlined_call_operand.hbm [shape: f32[2,4,384], index: 10, kind: output, shape index: {}]
  %s11 = sld [smem:[#allocation0]]
  $region77: #{tpu_custom_call.1} parent=0
    _
  %s13 = ssub.s32 1, %s11
  %s14 = scalar_select 0, %s13, %s11
  $region1: #{tpu_custom_call.1} parent=0
    #allocation2 [shape = 'u8[1536]{0}', space=vmem, size = 0x800, scoped, tag = 'input window, operand 1, single buffered']
    #allocation3 [shape = 's32[2]{0}', space=sflag, size = 0x8, scoped, tag = 'scoped memory for tpu_custom_call.1']
    #allocation4 [shape = 's32[2]{0}', space=sflag, size = 0x8, scoped, tag = 'scoped memory for tpu_custom_call.1']
    #allocation5 [shape = 'u8[12288]{0}', space=vmem, size = 0x3000, scoped, tag = 'output window, operand 0']
    %15 = vsyncpa [#allocation3], 0
    %16 = vsyncpa [#allocation4], 0
    %s17 = scalar_lea.sflag [#allocation4], 1
    %18 = vsyncpa %s17, 0
    loop: start=0, step=1, limit=4
    $region2: #{tpu_custom_call.1} parent=1 // loop_pre_header
      _
    $region3: #{tpu_custom_call.1} parent=1 // loop_header
      %s20 = sphi 0, %s24
      %p21 = scmp.ge.s32.totalorder %s20, 4
      %s30 = sphi 0, %s32
      %s33 = sphi 0, %s30
      %s34 = sphi 0, %s33
      %s50 = sphi 0, %s34
      %s54 = sphi 0, %s54
      %s56 = sphi 0, %s54
      %s57 = sphi 0, %s56
      %s71 = sphi 0, %s57
      %s75 = sphi 0, %s75
      %s77 = sphi 0, %s75
      %s78 = sphi 0, %s77
      %s92 = sphi 0, %s78
      %s96 = sphi 0, %s96
      %s98 = sphi 0, %s96
      %s99 = sphi 0, %s98
      %s113 = sphi 0, %s99
      %s117 = sphi 0, %s117
      %s119 = sphi 0, %s117
      %s120 = sphi 0, %s119
      %s134 = sphi 0, %s120
      %s138 = sphi 0, %s138
      %s140 = sphi 0, %s138
      %s141 = sphi 0, %s140
      %s155 = sphi 0, %s141
      %s159 = sphi 0, %s159
      %s161 = sphi 0, %s159
      %s162 = sphi 0, %s161
      %s176 = sphi 0, %s162
      %s180 = sphi 0, %s180
      %s182 = sphi 0, %s180
      %s183 = sphi 0, %s182
      %s197 = sphi 0, %s183
      %s201 = sphi 0, %s201
      %s203 = sphi 0, %s201
      %s204 = sphi 0, %s203
      %s218 = sphi 0, %s204
      %s222 = sphi 0, %s222
      %s224 = sphi 0, %s222
      %s225 = sphi 0, %s224
      %s239 = sphi 0, %s225
      %s245 = sphi 0, %s247
      %s248 = sphi 0, %s245
      %s249 = sphi 0, %s248
      %s265 = sphi 0, %s249
    $region4: #{tpu_custom_call.1} parent=1 // loop_header_branch
      %23 = sbr.rel (%p21) target = $region8
    $region5: #{tpu_custom_call.1} parent=1 // loop_body
      %s25 = ssub.s32 %s20, 1
      %s26 = ssub.s32 %s20, 2
      %s27 = sadd.s32 %s20, 1
      %s28 = ssub.s32 %s20, %s27
      %p29 = scmp.eq.s32.totalorder %s28, 0
      %s31 = sadd.s32 %s30, 1
      %s32 = scalar_select %p29, %s30, %s31
      %p35 = pneg %p29
      %p36 = scmp.eq.s32.totalorder %s20, 1
      %p37 = por %p35, %p36
      %p38 = scmp.ne.s32.totalorder %s30, %s33
      %p39 = scmp.eq.s32.totalorder %s20, 0
      %p40 = por %p38, %p39
      %p41 = scmp.ne.s32.totalorder %s30, %s33
      %p42 = scmp.eq.s32.totalorder %s25, 1
      %p43 = por %p41, %p42
      %p44 = scmp.ne.s32.totalorder %s33, %s34
      %p45 = scmp.eq.s32.totalorder %s25, 0
      %p46 = por %p44, %p45
      %p47 = scmp.ne.s32.totalorder %s33, %s34
      %p48 = scmp.eq.s32.totalorder %s26, 1
      %p49 = por %p47, %p48
      %p51 = scmp.ne.s32.totalorder %s34, %s50
      %p52 = scmp.eq.s32.totalorder %s26, 0
      %p53 = por %p51, %p52
      %s55 = sadd.s32 %s54, 1
      %p58 = scmp.eq.s32.totalorder %s20, 1
      %p59 = scmp.ne.s32.totalorder %s54, %s56
      %p60 = scmp.eq.s32.totalorder %s20, 0
      %p61 = por %p59, %p60
      %p62 = scmp.ne.s32.totalorder %s54, %s56
      %p63 = scmp.eq.s32.totalorder %s25, 1
      %p64 = por %p62, %p63
      %p65 = scmp.ne.s32.totalorder %s56, %s57
      %p66 = scmp.eq.s32.totalorder %s25, 0
      %p67 = por %p65, %p66
      %p68 = scmp.ne.s32.totalorder %s56, %s57
      %p69 = scmp.eq.s32.totalorder %s26, 1
      %p70 = por %p68, %p69
      %p72 = scmp.ne.s32.totalorder %s57, %s71
      %p73 = scmp.eq.s32.totalorder %s26, 0
      %p74 = por %p72, %p73
      %s76 = sadd.s32 %s75, 1
      %p79 = scmp.eq.s32.totalorder %s20, 1
      %p80 = scmp.ne.s32.totalorder %s75, %s77
      %p81 = scmp.eq.s32.totalorder %s20, 0
      %p82 = por %p80, %p81
      %p83 = scmp.ne.s32.totalorder %s75, %s77
      %p84 = scmp.eq.s32.totalorder %s25, 1
      %p85 = por %p83, %p84
      %p86 = scmp.ne.s32.totalorder %s77, %s78
      %p87 = scmp.eq.s32.totalorder %s25, 0
      %p88 = por %p86, %p87
      %p89 = scmp.ne.s32.totalorder %s77, %s78
      %p90 = scmp.eq.s32.totalorder %s26, 1
      %p91 = por %p89, %p90
      %p93 = scmp.ne.s32.totalorder %s78, %s92
      %p94 = scmp.eq.s32.totalorder %s26, 0
      %p95 = por %p93, %p94
      %s97 = sadd.s32 %s96, 1
      %p100 = scmp.eq.s32.totalorder %s20, 1
      %p101 = scmp.ne.s32.totalorder %s96, %s98
      %p102 = scmp.eq.s32.totalorder %s20, 0
      %p103 = por %p101, %p102
      %p104 = scmp.ne.s32.totalorder %s96, %s98
      %p105 = scmp.eq.s32.totalorder %s25, 1
      %p106 = por %p104, %p105
      %p107 = scmp.ne.s32.totalorder %s98, %s99
      %p108 = scmp.eq.s32.totalorder %s25, 0
      %p109 = por %p107, %p108
      %p110 = scmp.ne.s32.totalorder %s98, %s99
      %p111 = scmp.eq.s32.totalorder %s26, 1
      %p112 = por %p110, %p111
      %p114 = scmp.ne.s32.totalorder %s99, %s113
      %p115 = scmp.eq.s32.totalorder %s26, 0
      %p116 = por %p114, %p115
      %s118 = sadd.s32 %s117, 1
      %p121 = scmp.eq.s32.totalorder %s20, 1
      %p122 = scmp.ne.s32.totalorder %s117, %s119
      %p123 = scmp.eq.s32.totalorder %s20, 0
      %p124 = por %p122, %p123
      %p125 = scmp.ne.s32.totalorder %s117, %s119
      %p126 = scmp.eq.s32.totalorder %s25, 1
      %p127 = por %p125, %p126
      %p128 = scmp.ne.s32.totalorder %s119, %s120
      %p129 = scmp.eq.s32.totalorder %s25, 0
      %p130 = por %p128, %p129
      %p131 = scmp.ne.s32.totalorder %s119, %s120
      %p132 = scmp.eq.s32.totalorder %s26, 1
      %p133 = por %p131, %p132
      %p135 = scmp.ne.s32.totalorder %s120, %s134
      %p136 = scmp.eq.s32.totalorder %s26, 0
      %p137 = por %p135, %p136
      %s139 = sadd.s32 %s138, 1
      %p142 = scmp.eq.s32.totalorder %s20, 1
      %p143 = scmp.ne.s32.totalorder %s138, %s140
      %p144 = scmp.eq.s32.totalorder %s20, 0
      %p145 = por %p143, %p144
      %p146 = scmp.ne.s32.totalorder %s138, %s140
      %p147 = scmp.eq.s32.totalorder %s25, 1
      %p148 = por %p146, %p147
      %p149 = scmp.ne.s32.totalorder %s140, %s141
      %p150 = scmp.eq.s32.totalorder %s25, 0
      %p151 = por %p149, %p150
      %p152 = scmp.ne.s32.totalorder %s140, %s141
      %p153 = scmp.eq.s32.totalorder %s26, 1
      %p154 = por %p152, %p153
      %p156 = scmp.ne.s32.totalorder %s141, %s155
      %p157 = scmp.eq.s32.totalorder %s26, 0
      %p158 = por %p156, %p157
      %s160 = sadd.s32 %s159, 1
      %p163 = scmp.eq.s32.totalorder %s20, 1
      %p164 = scmp.ne.s32.totalorder %s159, %s161
      %p165 = scmp.eq.s32.totalorder %s20, 0
      %p166 = por %p164, %p165
      %p167 = scmp.ne.s32.totalorder %s159, %s161
      %p168 = scmp.eq.s32.totalorder %s25, 1
      %p169 = por %p167, %p168
      %p170 = scmp.ne.s32.totalorder %s161, %s162
      %p171 = scmp.eq.s32.totalorder %s25, 0
      %p172 = por %p170, %p171
      %p173 = scmp.ne.s32.totalorder %s161, %s162
      %p174 = scmp.eq.s32.totalorder %s26, 1
      %p175 = por %p173, %p174
      %p177 = scmp.ne.s32.totalorder %s162, %s176
      %p178 = scmp.eq.s32.totalorder %s26, 0
      %p179 = por %p177, %p178
      %s181 = sadd.s32 %s180, 1
      %p184 = scmp.eq.s32.totalorder %s20, 1
      %p185 = scmp.ne.s32.totalorder %s180, %s182
      %p186 = scmp.eq.s32.totalorder %s20, 0
      %p187 = por %p185, %p186
      %p188 = scmp.ne.s32.totalorder %s180, %s182
      %p189 = scmp.eq.s32.totalorder %s25, 1
      %p190 = por %p188, %p189
      %p191 = scmp.ne.s32.totalorder %s182, %s183
      %p192 = scmp.eq.s32.totalorder %s25, 0
      %p193 = por %p191, %p192
      %p194 = scmp.ne.s32.totalorder %s182, %s183
      %p195 = scmp.eq.s32.totalorder %s26, 1
      %p196 = por %p194, %p195
      %p198 = scmp.ne.s32.totalorder %s183, %s197
      %p199 = scmp.eq.s32.totalorder %s26, 0
      %p200 = por %p198, %p199
      %s202 = sadd.s32 %s201, 1
      %p205 = scmp.eq.s32.totalorder %s20, 1
      %p206 = scmp.ne.s32.totalorder %s201, %s203
      %p207 = scmp.eq.s32.totalorder %s20, 0
      %p208 = por %p206, %p207
      %p209 = scmp.ne.s32.totalorder %s201, %s203
      %p210 = scmp.eq.s32.totalorder %s25, 1
      %p211 = por %p209, %p210
      %p212 = scmp.ne.s32.totalorder %s203, %s204
      %p213 = scmp.eq.s32.totalorder %s25, 0
      %p214 = por %p212, %p213
      %p215 = scmp.ne.s32.totalorder %s203, %s204
      %p216 = scmp.eq.s32.totalorder %s26, 1
      %p217 = por %p215, %p216
      %p219 = scmp.ne.s32.totalorder %s204, %s218
      %p220 = scmp.eq.s32.totalorder %s26, 0
      %p221 = por %p219, %p220
      %s223 = sadd.s32 %s222, 1
      %p226 = scmp.eq.s32.totalorder %s20, 1
      %p227 = scmp.ne.s32.totalorder %s222, %s224
      %p228 = scmp.eq.s32.totalorder %s20, 0
      %p229 = por %p227, %p228
      %p230 = scmp.ne.s32.totalorder %s222, %s224
      %p231 = scmp.eq.s32.totalorder %s25, 1
      %p232 = por %p230, %p231
      %p233 = scmp.ne.s32.totalorder %s224, %s225
      %p234 = scmp.eq.s32.totalorder %s25, 0
      %p235 = por %p233, %p234
      %p236 = scmp.ne.s32.totalorder %s224, %s225
      %p237 = scmp.eq.s32.totalorder %s26, 1
      %p238 = por %p236, %p237
      %p240 = scmp.ne.s32.totalorder %s225, %s239
      %p241 = scmp.eq.s32.totalorder %s26, 0
      %p242 = por %p240, %p241
      %s243 = ssub.s32 %s20, %s27
      %p244 = scmp.eq.s32.totalorder %s243, 0
      %s246 = sadd.s32 %s245, 1
      %s247 = scalar_select %p244, %s245, %s246
      %p250 = pneg %p244
      %p251 = scmp.eq.s32.totalorder %s20, 1
      %p252 = por %p250, %p251
      %p253 = scmp.ne.s32.totalorder %s245, %s248
      %p254 = scmp.eq.s32.totalorder %s20, 0
      %p255 = por %p253, %p254
      %p256 = scmp.ne.s32.totalorder %s245, %s248
      %p257 = scmp.eq.s32.totalorder %s25, 1
      %p258 = por %p256, %p257
      %p259 = scmp.ne.s32.totalorder %s248, %s249
      %p260 = scmp.eq.s32.totalorder %s25, 0
      %p261 = por %p259, %p260
      %p262 = scmp.ne.s32.totalorder %s248, %s249
      %p263 = scmp.eq.s32.totalorder %s26, 1
      %p264 = por %p262, %p263
      %p266 = scmp.ne.s32.totalorder %s249, %s265
      %p267 = scmp.eq.s32.totalorder %s26, 0
      %p268 = por %p266, %p267
      %p269 = scmp.le.s32.totalorder 1, %s20
      %p270 = scmp.lt.s32.totalorder %s20, 3
      %p271 = pnand %p269, %p270
      %p272 = pneg %p271
      // Predicated region
      $region9: #{tpu_custom_call.1} parent=5 // pred_check
        _
      $region10: #{tpu_custom_call.1} parent=5 // pred_check_branch
        %274 = sbr.rel (%p271) target = $region12
      $region11: #{tpu_custom_call.1} parent=5 // pred_region
        %s275 = ssub.s32 %s20, 1
        // Predicated region
        $region13: #{tpu_custom_call.1} parent=11 // pred_check
          %p276 = pneg %p67
        $region14: #{tpu_custom_call.1} parent=11 // pred_check_branch
          %278 = sbr.rel (%p276) target = $region16
        $region15: #{tpu_custom_call.1} parent=11 // pred_region
          %s280 = ssub.s32 48, 48
          %281 = vsyncadd [#allocation3], %s280
          %s283 = sshll.u32 [#allocation2], 4
          %s284 = int_to_ptr.vmem [resolvable:$true] %s283
          %286 = dma.hbm_to_vmem [thread:$0]  %s1, 48, %s284, [#allocation3]
        $region16: #{tpu_custom_call.1} parent=11 // pred_fallthru
          _
        // Predicated region
        $region17: #{tpu_custom_call.1} parent=11 // pred_check
          %p287 = pneg %p88
        $region18: #{tpu_custom_call.1} parent=11 // pred_check_branch
          %289 = sbr.rel (%p287) target = $region20
        $region19: #{tpu_custom_call.1} parent=11 // pred_region
          _
        $region20: #{tpu_custom_call.1} parent=11 // pred_fallthru
          _
        // Predicated region
        $region21: #{tpu_custom_call.1} parent=11 // pred_check
          %p290 = pneg %p109
        $region22: #{tpu_custom_call.1} parent=11 // pred_check_branch
          %292 = sbr.rel (%p290) target = $region24
        $region23: #{tpu_custom_call.1} parent=11 // pred_region
          _
        $region24: #{tpu_custom_call.1} parent=11 // pred_fallthru
          _
        // Predicated region
        $region25: #{tpu_custom_call.1} parent=11 // pred_check
          %p293 = pneg %p130
        $region26: #{tpu_custom_call.1} parent=11 // pred_check_branch
          %295 = sbr.rel (%p293) target = $region28
        $region27: #{tpu_custom_call.1} parent=11 // pred_region
          _
        $region28: #{tpu_custom_call.1} parent=11 // pred_fallthru
          _
        // Predicated region
        $region29: #{tpu_custom_call.1} parent=11 // pred_check
          %p296 = pneg %p151
        $region30: #{tpu_custom_call.1} parent=11 // pred_check_branch
          %298 = sbr.rel (%p296) target = $region32
        $region31: #{tpu_custom_call.1} parent=11 // pred_region
          _
        $region32: #{tpu_custom_call.1} parent=11 // pred_fallthru
          _
        // Predicated region
        $region33: #{tpu_custom_call.1} parent=11 // pred_check
          %p299 = pneg %p172
        $region34: #{tpu_custom_call.1} parent=11 // pred_check_branch
          %301 = sbr.rel (%p299) target = $region36
        $region35: #{tpu_custom_call.1} parent=11 // pred_region
          _
        $region36: #{tpu_custom_call.1} parent=11 // pred_fallthru
          _
        // Predicated region
        $region37: #{tpu_custom_call.1} parent=11 // pred_check
          %p302 = pneg %p193
        $region38: #{tpu_custom_call.1} parent=11 // pred_check_branch
          %304 = sbr.rel (%p302) target = $region40
        $region39: #{tpu_custom_call.1} parent=11 // pred_region
          _
        $region40: #{tpu_custom_call.1} parent=11 // pred_fallthru
          _
        // Predicated region
        $region41: #{tpu_custom_call.1} parent=11 // pred_check
          %p305 = pneg %p214
        $region42: #{tpu_custom_call.1} parent=11 // pred_check_branch
          %307 = sbr.rel (%p305) target = $region44
        $region43: #{tpu_custom_call.1} parent=11 // pred_region
          _
        $region44: #{tpu_custom_call.1} parent=11 // pred_fallthru
          _
        // Predicated region
        $region45: #{tpu_custom_call.1} parent=11 // pred_check
          %p308 = pneg %p235
        $region46: #{tpu_custom_call.1} parent=11 // pred_check_branch
          %310 = sbr.rel (%p308) target = $region48
        $region47: #{tpu_custom_call.1} parent=11 // pred_region
          _
        $region48: #{tpu_custom_call.1} parent=11 // pred_fallthru
          _
      $region12: #{tpu_custom_call.1} parent=5 // pred_fallthru
        _
      %p311 = scmp.lt.s32.totalorder %s20, 2
      // Predicated region
      $region49: #{tpu_custom_call.1} parent=5 // pred_check
        %p312 = pneg %p311
      $region50: #{tpu_custom_call.1} parent=5 // pred_check_branch
        %314 = sbr.rel (%p312) target = $region52
      $region51: #{tpu_custom_call.1} parent=5 // pred_region
        // Predicated region
        $region53: #{tpu_custom_call.1} parent=51 // pred_check
          %p315 = pneg %p40
        $region54: #{tpu_custom_call.1} parent=51 // pred_check_branch
          %317 = sbr.rel (%p315) target = $region56
        $region55: #{tpu_custom_call.1} parent=51 // pred_region
          %p318 = scmp.lt.s32.totalorder %s20, 1
          %s319 = scalar_select %p318, %s20, 1
          %s320 = smul.addr %s319, 3
          %s321 = smul.addr %s320, 4
          %s322 = scalar_lea.vmem %s0, %s321
        $region56: #{tpu_custom_call.1} parent=51 // pred_fallthru
          _
      $region52: #{tpu_custom_call.1} parent=5 // pred_fallthru
        _
      %p323 = scmp.le.s32.totalorder 1, %s20
      %p324 = scmp.lt.s32.totalorder %s20, 3
      %p325 = pnand %p323, %p324
      %p326 = pneg %p325
      // Predicated region
      $region57: #{tpu_custom_call.1} parent=5 // pred_check
        _
      $region58: #{tpu_custom_call.1} parent=5 // pred_check_branch
        %328 = sbr.rel (%p325) target = $region60
      $region59: #{tpu_custom_call.1} parent=5 // pred_region
        %s329 = ssub.s32 %s20, 1
        // Predicated region
        $region61: #{tpu_custom_call.1} parent=59 // pred_check
          %p330 = pneg %p67
        $region62: #{tpu_custom_call.1} parent=59 // pred_check_branch
          %332 = sbr.rel (%p330) target = $region64
        $region63: #{tpu_custom_call.1} parent=59 // pred_region
          %333 = dma.done [#allocation3], 48
        $region64: #{tpu_custom_call.1} parent=59 // pred_fallthru
          _
        %p334 = scmp.lt.s32.totalorder %s25, 1
        %s335 = scalar_select %p334, %s25, 1
        %s336 = smul.addr %s335, 3
        %s337 = smul.addr %s336, 4
        %s338 = scalar_lea.vmem %s0, %s337
        %p339 = pneg %p46
        %p340 = pneg %p43
        %p341 = pneg %p67
        %p342 = pneg %p64
        %p343 = pneg %p88
        %p344 = pneg %p85
        %p345 = pneg %p109
        %p346 = pneg %p106
        %p347 = pneg %p130
        %p348 = pneg %p127
        %p349 = pneg %p151
        %p350 = pneg %p148
        %p351 = pneg %p172
        %p352 = pneg %p169
        %p353 = pneg %p193
        %p354 = pneg %p190
        %p355 = pneg %p214
        %p356 = pneg %p211
        %p357 = pneg %p235
        %p358 = pneg %p232
        %p359 = pneg %p261
        %p360 = pneg %p258
        %s361 = sand.u32 %s248, 1
        %s362 = scalar_lea.sflag [#allocation4], %s361
        %s363 = sand.u32 %s248, 1
        %s364 = smul.addr %s363, 12
        %s365 = scalar_lea.vmem [#allocation5], %s364
        %p366 = scmp.lt.s32.totalorder %s25, 1
        %s367 = scalar_select %p366, %s25, 1
        %s368 = smul.addr %s367, 3
        %s369 = smul.addr %s368, 4
        %s370 = scalar_lea.vmem %s0, %s369
        %v371 = vld [vmem:[%s370] sm:$0xff]
        %v372 = vld [vmem:[%s370 + $0x8] sm:$0xf]
        %v373 = vld [vmem:[#allocation2] sm:$0x7]
        %v374 = vlaneseq
        %v375 = vand.u32 %v374, 127
        %v376 = vadd.s32 %v375, 128
        %v377 = vadd.s32 %v375, 256
        %vm378 = vcmp.lt.s32.totalorder %v375, 18
        %vm379 = vcmp.lt.s32.totalorder %v376, 18
        %vm380 = vcmp.lt.s32.totalorder %v377, 18
        %vm381 = vcmp.ge.s32.totalorder %v375, 306
        %vm382 = vcmp.ge.s32.totalorder %v376, 306
        %vm383 = vcmp.ge.s32.totalorder %v377, 306
        %vm384 = vcmp.eq.s32.totalorder %v373, 0
        %vm385 = vcmp.eq.s32.totalorder %v373, 17
        %387 = vrot.lane.b32.xlu0 %v372, 19
        %v388 = vpop.permute.xlu0 %387
        %v391 = vcombine.high %v371, %v371
        %392 = vrot.lane.b32.xlu0 %v371, 19
        %v393 = vpop.permute.xlu0 %392
        %394 = vrot.lane.b32.xlu0 %v391, 19
        %v395 = vpop.permute.xlu0 %394
        %vm396 = vcmask 154624
        %v397 = vsel %vm396, %v393, %v395
        %v398 = vsel %vm396, %v395, %v388
        %v402 = vsel %vm396, %v388, %v393
        %403 = vrot.lane.b32.xlu0 %v372, 18
        %v404 = vpop.permute.xlu0 %403
        %406 = vrot.lane.b32.xlu0 %v371, 18
        %v407 = vpop.permute.xlu0 %406
        %408 = vrot.lane.b32.xlu0 %v391, 18
        %v409 = vpop.permute.xlu0 %408
        %vm410 = vcmask 146432
        %v411 = vsel %vm410, %v407, %v409
        %v412 = vsel %vm410, %v409, %v404
        %v414 = vsel %vm410, %v404, %v407
        %415 = vrot.lane.b32.xlu0 %v372, 17
        %v416 = vpop.permute.xlu0 %415
        %418 = vrot.lane.b32.xlu0 %v371, 17
        %v419 = vpop.permute.xlu0 %418
        %420 = vrot.lane.b32.xlu0 %v391, 17
        %v421 = vpop.permute.xlu0 %420
        %vm422 = vcmask 138240
        %v423 = vsel %vm422, %v419, %v421
        %v424 = vsel %vm422, %v421, %v416
        %v428 = vsel %vm422, %v416, %v419
        %429 = vrot.lane.b32.xlu0 %v372, 1
        %v430 = vpop.permute.xlu0 %429
        %432 = vrot.lane.b32.xlu0 %v371, 1
        %v433 = vpop.permute.xlu0 %432
        %434 = vrot.lane.b32.xlu0 %v391, 1
        %v435 = vpop.permute.xlu0 %434
        %vm436 = vcmask 7168
        %v437 = vsel %vm436, %v433, %v435
        %v438 = vsel %vm436, %v435, %v430
        %v440 = vsel %vm436, %v430, %v433
        %441 = vrot.lane.b32.xlu0 %v371, 127
        %v442 = vpop.permute.xlu0 %441
        %443 = vrot.lane.b32.xlu0 %v391, 127
        %v444 = vpop.permute.xlu0 %443
        %445 = vrot.lane.b32.xlu0 %v372, 127
        %v446 = vpop.permute.xlu0 %445
        %vm447 = vcmask 1039360
        %v448 = vsel %vm447, %v442, %v444
        %v449 = vsel %vm447, %v444, %v446
        %v452 = vsel %vm447, %v446, %v442
        %453 = vrot.lane.b32.xlu0 %v371, 111
        %v454 = vpop.permute.xlu0 %453
        %455 = vrot.lane.b32.xlu0 %v391, 111
        %v456 = vpop.permute.xlu0 %455
        %457 = vrot.lane.b32.xlu0 %v372, 111
        %v458 = vpop.permute.xlu0 %457
        %vm459 = vcmask 908288
        %v460 = vsel %vm459, %v454, %v456
        %v461 = vsel %vm459, %v456, %v458
        %v466 = vsel %vm459, %v458, %v454
        %467 = vrot.lane.b32.xlu0 %v371, 110
        %v468 = vpop.permute.xlu0 %467
        %469 = vrot.lane.b32.xlu0 %v391, 110
        %v470 = vpop.permute.xlu0 %469
        %471 = vrot.lane.b32.xlu0 %v372, 110
        %v472 = vpop.permute.xlu0 %471
        %vm473 = vcmask 900096
        %v474 = vsel %vm473, %v468, %v470
        %v475 = vsel %vm473, %v470, %v472
        %v478 = vsel %vm473, %v472, %v468
        %479 = vrot.lane.b32.xlu0 %v371, 109
        %v480 = vpop.permute.xlu0 %479
        %481 = vrot.lane.b32.xlu0 %v391, 109
        %v482 = vpop.permute.xlu0 %481
        %483 = vrot.lane.b32.xlu0 %v372, 109
        %v484 = vpop.permute.xlu0 %483
        %vm485 = vcmask 891904
        %v486 = vsel %vm485, %v480, %v482
        %v487 = vsel %vm485, %v482, %v484
        %v490 = vsel %vm485, %v484, %v480
        %v492 = vrot.slane %v414, 4
        %v493 = vrot.slane %v411, 4
        %v494 = vrot.slane %v412, 4
        %v499 = vrot.slane %v440, 4
        %v500 = vrot.slane %v437, 4
        %v501 = vrot.slane %v438, 4
        %v507 = vrot.slane %v448, 4
        %v508 = vrot.slane %v449, 4
        %v509 = vrot.slane %v452, 4
        %v514 = vrot.slane %v474, 4
        %v515 = vrot.slane %v475, 4
        %v516 = vrot.slane %v478, 4
        %vm520 = vcmask 1043456
        %v521 = vsel %vm520, %v402, %v492
        %v522 = vsel %vm520, %v397, %v493
        %v523 = vsel %vm520, %v398, %v494
        %v524 = vsel %vm520, %v428, %v499
        %v525 = vsel %vm520, %v423, %v500
        %v526 = vsel %vm520, %v424, %v501
        %v527 = vsel %vm520, %v371, %v507
        %v528 = vsel %vm520, %v391, %v508
        %v529 = vsel %vm520, %v372, %v509
        %v530 = vsel %vm520, %v460, %v514
        %v531 = vsel %vm520, %v461, %v515
        %v532 = vsel %vm520, %v466, %v516
        %v533 = vld [vmem:[%s2] sm:$0xf]
        %v534 = vld [vmem:[%s3] sm:$0xf]
        %536 = vset.pattern.permute.xlu0 0
        %537 = vperm.xlu0 %536, %v534
        %v538 = vpop.permute.xlu0 %537
        %vm540 = vcmask 293888
        %v542 = vsel %vm540, %v533, 0
        %v544 = vsel %vm520, %v486, 0
        %v546 = vsel %vm520, %v487, 0
        %v549 = vsel %vm520, %v490, 0
        %551 = vmatprep.subr.mxu0 %v522
        %552 = vmatpush1.msra.mxu0 %v521
        %553 = vmatprep.subr.mxu0 %v525
        %554 = vmatpush1.msra.mxu0 %v524
        %555 = vmatprep.subr.mxu0 %v528
        %556 = vmatpush1.msra.mxu0 %v527
        %557 = vmatprep.subr.mxu0 %v531
        %558 = vmatpush1.msra.mxu0 %v530
        %559 = vmatprep.subr.mxu0 %v546
        %560 = vmatpush1.msra.mxu0 %v544
        %561 = vmatprep.subr.mxu0 0.0
        %562 = vmatpush1.msra.mxu0 0.0
        %563 = vmatprep.subr.mxu0 0.0
        %564 = vmatpush1.msra.mxu0 0.0
        %565 = vmatprep.subr.mxu0 0.0
        %566 = vmatpush1.msra.mxu0 0.0
        %567 = vmatprep.subr.mxu0 0.0
        %568 = vmatpush1.msra.mxu0 0.0
        %569 = vmatprep.subr.mxu0 0.0
        %570 = vmatpush1.msra.mxu0 0.0
        %571 = vmatprep.subr.mxu0 0.0
        %572 = vmatpush1.msra.mxu0 0.0
        %573 = vmatprep.subr.mxu0 0.0
        %574 = vmatpush1.msra.mxu0 0.0
        %575 = vmatprep.subr.mxu0 0.0
        %576 = vmatpush1.msra.mxu0 0.0
        %577 = vmatprep.subr.mxu0 0.0
        %578 = vmatpush1.msra.mxu0 0.0
        %579 = vmatprep.subr.mxu0 0.0
        %580 = vmatpush1.msra.mxu0 0.0
        %581 = vmatprep.subr.mxu0 0.0
        %582 = vmatpush1.msra.mxu0 0.0
        %583 = vmatprep.subr.mxu0 0.0
        %584 = vmatpush1.msra.mxu0 0.0
        %585 = vmatprep.subr.mxu0 0.0
        %586 = vmatpush1.msra.mxu0 0.0
        %587 = vmatprep.subr.mxu0 0.0
        %588 = vmatpush1.msra.mxu0 0.0
        %589 = vmatprep.subr.mxu0 0.0
        %590 = vmatpush1.msra.mxu0 0.0
        %591 = vmatprep.subr.mxu0 0.0
        %592 = vmatpush1.msra.mxu0 0.0
        %593 = vmatprep.subr.mxu0 0.0
        %594 = vmatpush1.msra.mxu0 0.0
        %595 = vmatprep.subr.mxu0 0.0
        %596 = vmatpush1.msra.mxu0 0.0
        %597 = vmatprep.subr.mxu0 0.0
        %598 = vmatpush1.msra.mxu0 0.0
        %599 = vmatprep.subr.mxu0 0.0
        %600 = vmatpush1.msra.mxu0 0.0
        %601 = vmatprep.subr.mxu0 0.0
        %602 = vmatpush1.msra.mxu0 0.0
        %603 = vmatprep.subr.mxu0 0.0
        %604 = vmatpush1.msra.mxu0 0.0
        %605 = vmatprep.subr.mxu0 0.0
        %606 = vmatpush1.msra.mxu0 0.0
        %607 = vmatprep.subr.mxu0 0.0
        %608 = vmatpush1.msra.mxu0 0.0
        %609 = vmatprep.subr.mxu0 0.0
        %610 = vmatpush1.msra.mxu0 0.0
        %611 = vmatprep.subr.mxu0 0.0
        %612 = vmatpush1.msra.mxu0 0.0
        %613 = vmatprep.subr.mxu0 0.0
        %614 = vmatpush1.msra.mxu0 0.0
        %615 = vmatprep.mubr.f32.mxu0 0.0
        %616 = vmatmul.mubr.f32.gmra.mrb[0].mxu0 %v542
        %v617 = vpop.f32.mrb[0].mxu0
        %v618 = vadd.f32 %v538, %v617
        %v619 = vpop.f32.mrb[0].mxu0
        %v620 = vadd.f32 %v538, %v619
        %621 = vdwg.mxu0
        %622 = vmatprep.subr.mxu0 0.0
        %623 = vmatpush1.msra.mxu0 %v523
        %624 = vmatprep.subr.mxu0 0.0
        %625 = vmatpush1.msra.mxu0 %v526
        %626 = vmatprep.subr.mxu0 0.0
        %627 = vmatpush1.msra.mxu0 %v529
        %628 = vmatprep.subr.mxu0 0.0
        %629 = vmatpush1.msra.mxu0 %v532
        %630 = vmatprep.subr.mxu0 0.0
        %631 = vmatpush1.msra.mxu0 %v549
        %632 = vmatprep.subr.mxu0 0.0
        %633 = vmatpush1.msra.mxu0 0.0
        %634 = vmatprep.subr.mxu0 0.0
        %635 = vmatpush1.msra.mxu0 0.0
        %636 = vmatprep.subr.mxu0 0.0
        %637 = vmatpush1.msra.mxu0 0.0
        %638 = vmatprep.subr.mxu0 0.0
        %639 = vmatpush1.msra.mxu0 0.0
        %640 = vmatprep.subr.mxu0 0.0
        %641 = vmatpush1.msra.mxu0 0.0
        %642 = vmatprep.subr.mxu0 0.0
        %643 = vmatpush1.msra.mxu0 0.0
        %644 = vmatprep.subr.mxu0 0.0
        %645 = vmatpush1.msra.mxu0 0.0
        %646 = vmatprep.subr.mxu0 0.0
        %647 = vmatpush1.msra.mxu0 0.0
        %648 = vmatprep.subr.mxu0 0.0
        %649 = vmatpush1.msra.mxu0 0.0
        %650 = vmatprep.subr.mxu0 0.0
        %651 = vmatpush1.msra.mxu0 0.0
        %652 = vmatprep.subr.mxu0 0.0
        %653 = vmatpush1.msra.mxu0 0.0
        %654 = vmatprep.subr.mxu0 0.0
        %655 = vmatpush1.msra.mxu0 0.0
        %656 = vmatprep.subr.mxu0 0.0
        %657 = vmatpush1.msra.mxu0 0.0
        %658 = vmatprep.subr.mxu0 0.0
        %659 = vmatpush1.msra.mxu0 0.0
        %660 = vmatprep.subr.mxu0 0.0
        %661 = vmatpush1.msra.mxu0 0.0
        %662 = vmatprep.subr.mxu0 0.0
        %663 = vmatpush1.msra.mxu0 0.0
        %664 = vmatprep.subr.mxu0 0.0
        %665 = vmatpush1.msra.mxu0 0.0
        %666 = vmatprep.subr.mxu0 0.0
        %667 = vmatpush1.msra.mxu0 0.0
        %668 = vmatprep.subr.mxu0 0.0
        %669 = vmatpush1.msra.mxu0 0.0
        %670 = vmatprep.subr.mxu0 0.0
        %671 = vmatpush1.msra.mxu0 0.0
        %672 = vmatprep.subr.mxu0 0.0
        %673 = vmatpush1.msra.mxu0 0.0
        %674 = vmatprep.subr.mxu0 0.0
        %675 = vmatpush1.msra.mxu0 0.0
        %676 = vmatprep.subr.mxu0 0.0
        %677 = vmatpush1.msra.mxu0 0.0
        %678 = vmatprep.subr.mxu0 0.0
        %679 = vmatpush1.msra.mxu0 0.0
        %680 = vmatprep.subr.mxu0 0.0
        %681 = vmatpush1.msra.mxu0 0.0
        %682 = vmatprep.subr.mxu0 0.0
        %683 = vmatpush1.msra.mxu0 0.0
        %684 = vmatprep.subr.mxu0 0.0
        %685 = vmatpush1.msra.mxu0 0.0
        %686 = vmatprep.mubr.f32.mxu0 0.0
        %687 = vmatmul.mubr.f32.gmra.mrb[0].mxu0 %v542
        %v688 = vpop.f32.mrb[0].mxu0
        %v689 = vadd.f32 %v538, %v688
        %v690 = vpop.f32.mrb[0].mxu0
        %691 = vdwg.mxu0
        %v692 = vsel %vm520, %v618, 0.0
        %v693 = vrot.slane %v692, 4
        %v694 = vadd.f32 %v692, %v693
        %v695 = vrot.slane %v694, 2
        %v696 = vadd.f32 %v694, %v695
        %v697 = vrot.slane %v696, 1
        %v698 = vadd.f32 %v696, %v697
        %v699 = vsel %vm520, %v620, 0.0
        %v700 = vrot.slane %v699, 4
        %v701 = vadd.f32 %v699, %v700
        %v702 = vrot.slane %v701, 2
        %v703 = vadd.f32 %v701, %v702
        %v704 = vrot.slane %v703, 1
        %v705 = vadd.f32 %v703, %v704
        %v706 = vsel %vm520, %v689, 0.0
        %v707 = vrot.slane %v706, 4
        %v708 = vadd.f32 %v706, %v707
        %v709 = vrot.slane %v708, 2
        %v710 = vadd.f32 %v708, %v709
        %v711 = vrot.slane %v710, 1
        %v712 = vadd.f32 %v710, %v711
        %v713 = vmul.f32 %v698, 0.25
        %v714 = vmul.f32 %v705, 0.25
        %v715 = vmul.f32 %v712, 0.25
        %v716 = vsub.f32 %v618, %v713
        %v717 = vsub.f32 %v620, %v714
        %v718 = vsub.f32 %v689, %v715
        %v719 = vmul.f32 %v716, %v716
        %v720 = vmul.f32 %v717, %v717
        %v721 = vmul.f32 %v718, %v718
        %v722 = vsel %vm520, %v719, 0.0
        %v723 = vrot.slane %v722, 4
        %v724 = vadd.f32 %v722, %v723
        %v725 = vrot.slane %v724, 2
        %v726 = vadd.f32 %v724, %v725
        %v727 = vrot.slane %v726, 1
        %v728 = vadd.f32 %v726, %v727
        %v729 = vsel %vm520, %v720, 0.0
        %v730 = vrot.slane %v729, 4
        %v731 = vadd.f32 %v729, %v730
        %v732 = vrot.slane %v731, 2
        %v733 = vadd.f32 %v731, %v732
        %v734 = vrot.slane %v733, 1
        %v735 = vadd.f32 %v733, %v734
        %v736 = vsel %vm520, %v721, 0.0
        %v737 = vrot.slane %v736, 4
        %v738 = vadd.f32 %v736, %v737
        %v739 = vrot.slane %v738, 2
        %v740 = vadd.f32 %v738, %v739
        %v741 = vrot.slane %v740, 1
        %v742 = vadd.f32 %v740, %v741
        %v743 = vmul.f32 %v728, 0.33333334
        %v744 = vmul.f32 %v735, 0.33333334
        %v745 = vmul.f32 %v742, 0.33333334
        %v746 = vld [vmem:[%s4] sm:$0xf]
        %748 = vset.pattern.permute.xlu0 0
        %749 = vperm.xlu0 %748, %v746
        %v750 = vpop.permute.xlu0 %749
        %v752 = vmul.f32 %v750, %v716
        %v753 = vmul.f32 %v750, %v717
        %v754 = vmul.f32 %v750, %v718
        %v755 = vadd.f32 %v743, 0.001
        %v756 = vadd.f32 %v744, 0.001
        %v757 = vadd.f32 %v745, 0.001
        %v758 = vrsqrt.pop %v755
        %v759 = vrsqrt.pop %v756
        %v760 = vrsqrt.pop %v757
        %v761 = vmul.f32 %v752, %v758
        %v762 = vmul.f32 %v753, %v759
        %v763 = vmul.f32 %v754, %v760
        %v764 = vld [vmem:[%s5] sm:$0xf]
        %766 = vset.pattern.permute.xlu0 0
        %767 = vperm.xlu0 %766, %v764
        %v768 = vpop.permute.xlu0 %767
        %v770 = vadd.f32 %v761, %v768
        %v771 = vadd.f32 %v762, %v768
        %v772 = vadd.f32 %v763, %v768
        %v773 = vmax.f32 %v770, 0.0
        %v774 = vmax.f32 %v771, 0.0
        %v775 = vmax.f32 %v772, 0.0
        %779 = vrot.lane.b32.xlu0 %v773, 126
        %v780 = vpop.permute.xlu0 %779
        %781 = vrot.lane.b32.xlu0 %v774, 126
        %v782 = vpop.permute.xlu0 %781
        %783 = vrot.lane.b32.xlu0 %v775, 126
        %v784 = vpop.permute.xlu0 %783
        %vm785 = vcmask 1031168
        %v786 = vsel %vm785, %v780, %v782
        %v787 = vsel %vm785, %v782, %v784
        %v792 = vsel %vm785, %v784, %v780
        %793 = vrot.lane.b32.xlu0 %v775, 2
        %v794 = vpop.permute.xlu0 %793
        %796 = vrot.lane.b32.xlu0 %v773, 2
        %v797 = vpop.permute.xlu0 %796
        %798 = vrot.lane.b32.xlu0 %v774, 2
        %v799 = vpop.permute.xlu0 %798
        %vm800 = vcmask 15360
        %v801 = vsel %vm800, %v797, %v799
        %v802 = vsel %vm800, %v799, %v794
        %v806 = vsel %vm800, %v794, %v797
        %v807 = vsel %vm385, 1, 0
        %v808 = vlaneseq
        %v809 = vshrl.u32 %v808, 7
        %v810 = vsub.s32 0, %v809
        %v811 = vrot.slane %v807, %v810
        %v812 = vlaneseq
        %v813 = vshrl.u32 %v812, 7
        %v814 = vsub.s32 1, %v813
        %v815 = vrot.slane %v807, %v814
        %v816 = vlaneseq
        %v817 = vshrl.u32 %v816, 7
        %v818 = vsub.s32 2, %v817
        %v819 = vrot.slane %v807, %v818
        %vm820 = vcmp.eq.s32.totalorder %v811, 1
        %vm821 = vcmp.eq.s32.totalorder %v815, 1
        %vm822 = vcmp.eq.s32.totalorder %v819, 1
        %v823 = vsel %vm820, %v806, %v773
        %v824 = vsel %vm821, %v801, %v774
        %v825 = vsel %vm822, %v802, %v775
        %v826 = vsel %vm384, 1, 0
        %v827 = vlaneseq
        %v828 = vshrl.u32 %v827, 7
        %v829 = vsub.s32 0, %v828
        %v830 = vrot.slane %v826, %v829
        %v831 = vlaneseq
        %v832 = vshrl.u32 %v831, 7
        %v833 = vsub.s32 1, %v832
        %v834 = vrot.slane %v826, %v833
        %v835 = vlaneseq
        %v836 = vshrl.u32 %v835, 7
        %v837 = vsub.s32 2, %v836
        %v838 = vrot.slane %v826, %v837
        %vm839 = vcmp.eq.s32.totalorder %v830, 1
        %vm840 = vcmp.eq.s32.totalorder %v834, 1
        %vm841 = vcmp.eq.s32.totalorder %v838, 1
        %v842 = vsel %vm839, %v786, %v823
        %v843 = vsel %vm840, %v787, %v824
        %v844 = vsel %vm841, %v792, %v825
        %848 = vrot.lane.b32.xlu0 %v842, 92
        %v849 = vpop.permute.xlu0 %848
        %850 = vrot.lane.b32.xlu0 %v843, 92
        %v851 = vpop.permute.xlu0 %850
        %852 = vrot.lane.b32.xlu0 %v844, 92
        %v853 = vpop.permute.xlu0 %852
        %vm854 = vcmask 752640
        %v855 = vsel %vm854, %v849, %v851
        %v856 = vsel %vm854, %v851, %v853
        %v861 = vsel %vm854, %v853, %v849
        %862 = vrot.lane.b32.xlu0 %v844, 36
        %v863 = vpop.permute.xlu0 %862
        %865 = vrot.lane.b32.xlu0 %v842, 36
        %v866 = vpop.permute.xlu0 %865
        %867 = vrot.lane.b32.xlu0 %v843, 36
        %v868 = vpop.permute.xlu0 %867
        %v869 = vsel %vm540, %v866, %v868
        %v870 = vsel %vm540, %v868, %v863
        %v874 = vsel %vm540, %v863, %v866
        %v875 = vsel %vm381, 1, 0
        %v876 = vsel %vm382, 1, 0
        %v877 = vsel %vm383, 1, 0
        %vm878 = vcmp.eq.s32.totalorder %v875, 1
        %vm879 = vcmp.eq.s32.totalorder %v876, 1
        %vm880 = vcmp.eq.s32.totalorder %v877, 1
        %v881 = vsel %vm878, %v874, %v842
        %v882 = vsel %vm879, %v869, %v843
        %v883 = vsel %vm880, %v870, %v844
        %v884 = vsel %vm378, 1, 0
        %v885 = vsel %vm379, 1, 0
        %v886 = vsel %vm380, 1, 0
        %vm887 = vcmp.eq.s32.totalorder %v884, 1
        %vm888 = vcmp.eq.s32.totalorder %v885, 1
        %vm889 = vcmp.eq.s32.totalorder %v886, 1
        %v890 = vsel %vm887, %v855, %v881
        %v891 = vsel %vm888, %v856, %v882
        %v892 = vsel %vm889, %v861, %v883
        %894 = vrot.lane.b32.xlu0 %v892, 19
        %v895 = vpop.permute.xlu0 %894
        %899 = vrot.lane.b32.xlu0 %v890, 19
        %v900 = vpop.permute.xlu0 %899
        %901 = vrot.lane.b32.xlu0 %v891, 19
        %v902 = vpop.permute.xlu0 %901
        %v903 = vsel %vm396, %v900, %v902
        %v904 = vsel %vm396, %v902, %v895
        %v908 = vsel %vm396, %v895, %v900
        %909 = vrot.lane.b32.xlu0 %v892, 18
        %v910 = vpop.permute.xlu0 %909
        %912 = vrot.lane.b32.xlu0 %v890, 18
        %v913 = vpop.permute.xlu0 %912
        %914 = vrot.lane.b32.xlu0 %v891, 18
        %v915 = vpop.permute.xlu0 %914
        %v916 = vsel %vm410, %v913, %v915
        %v917 = vsel %vm410, %v915, %v910
        %v919 = vsel %vm410, %v910, %v913
        %920 = vrot.lane.b32.xlu0 %v892, 17
        %v921 = vpop.permute.xlu0 %920
        %923 = vrot.lane.b32.xlu0 %v890, 17
        %v924 = vpop.permute.xlu0 %923
        %925 = vrot.lane.b32.xlu0 %v891, 17
        %v926 = vpop.permute.xlu0 %925
        %v927 = vsel %vm422, %v924, %v926
        %v928 = vsel %vm422, %v926, %v921
        %v932 = vsel %vm422, %v921, %v924
        %933 = vrot.lane.b32.xlu0 %v892, 1
        %v934 = vpop.permute.xlu0 %933
        %936 = vrot.lane.b32.xlu0 %v890, 1
        %v937 = vpop.permute.xlu0 %936
        %938 = vrot.lane.b32.xlu0 %v891, 1
        %v939 = vpop.permute.xlu0 %938
        %v940 = vsel %vm436, %v937, %v939
        %v941 = vsel %vm436, %v939, %v934
        %v943 = vsel %vm436, %v934, %v937
        %944 = vrot.lane.b32.xlu0 %v890, 127
        %v945 = vpop.permute.xlu0 %944
        %946 = vrot.lane.b32.xlu0 %v891, 127
        %v947 = vpop.permute.xlu0 %946
        %948 = vrot.lane.b32.xlu0 %v892, 127
        %v949 = vpop.permute.xlu0 %948
        %v950 = vsel %vm447, %v945, %v947
        %v951 = vsel %vm447, %v947, %v949
        %v954 = vsel %vm447, %v949, %v945
        %955 = vrot.lane.b32.xlu0 %v890, 111
        %v956 = vpop.permute.xlu0 %955
        %957 = vrot.lane.b32.xlu0 %v891, 111
        %v958 = vpop.permute.xlu0 %957
        %959 = vrot.lane.b32.xlu0 %v892, 111
        %v960 = vpop.permute.xlu0 %959
        %v961 = vsel %vm459, %v956, %v958
        %v962 = vsel %vm459, %v958, %v960
        %v967 = vsel %vm459, %v960, %v956
        %968 = vrot.lane.b32.xlu0 %v890, 110
        %v969 = vpop.permute.xlu0 %968
        %970 = vrot.lane.b32.xlu0 %v891, 110
        %v971 = vpop.permute.xlu0 %970
        %972 = vrot.lane.b32.xlu0 %v892, 110
        %v973 = vpop.permute.xlu0 %972
        %v974 = vsel %vm473, %v969, %v971
        %v975 = vsel %vm473, %v971, %v973
        %v978 = vsel %vm473, %v973, %v969
        %979 = vrot.lane.b32.xlu0 %v890, 109
        %v980 = vpop.permute.xlu0 %979
        %981 = vrot.lane.b32.xlu0 %v891, 109
        %v982 = vpop.permute.xlu0 %981
        %983 = vrot.lane.b32.xlu0 %v892, 109
        %v984 = vpop.permute.xlu0 %983
        %v985 = vsel %vm485, %v980, %v982
        %v986 = vsel %vm485, %v982, %v984
        %v989 = vsel %vm485, %v984, %v980
        %v991 = vrot.slane %v919, 4
        %v992 = vrot.slane %v916, 4
        %v993 = vrot.slane %v917, 4
        %v998 = vrot.slane %v943, 4
        %v999 = vrot.slane %v940, 4
        %v1000 = vrot.slane %v941, 4
        %v1005 = vrot.slane %v950, 4
        %v1006 = vrot.slane %v951, 4
        %v1007 = vrot.slane %v954, 4
        %v1012 = vrot.slane %v974, 4
        %v1013 = vrot.slane %v975, 4
        %v1014 = vrot.slane %v978, 4
        %v1018 = vsel %vm520, %v908, %v991
        %v1019 = vsel %vm520, %v903, %v992
        %v1020 = vsel %vm520, %v904, %v993
        %v1021 = vsel %vm520, %v932, %v998
        %v1022 = vsel %vm520, %v927, %v999
        %v1023 = vsel %vm520, %v928, %v1000
        %v1024 = vsel %vm520, %v890, %v1005
        %v1025 = vsel %vm520, %v891, %v1006
        %v1026 = vsel %vm520, %v892, %v1007
        %v1027 = vsel %vm520, %v961, %v1012
        %v1028 = vsel %vm520, %v962, %v1013
        %v1029 = vsel %vm520, %v967, %v1014
        %v1030 = vld [vmem:[%s6] sm:$0xf]
        %v1031 = vld [vmem:[%s7] sm:$0xf]
        %1033 = vset.pattern.permute.xlu0 0
        %1034 = vperm.xlu0 %1033, %v1031
        %v1035 = vpop.permute.xlu0 %1034
        %v1038 = vsel %vm540, %v1030, 0
        %v1040 = vsel %vm520, %v985, 0
        %v1042 = vsel %vm520, %v986, 0
        %v1045 = vsel %vm520, %v989, 0
        %1047 = vmatprep.subr.mxu0 %v1019
        %1048 = vmatpush1.msra.mxu0 %v1018
        %1049 = vmatprep.subr.mxu0 %v1022
        %1050 = vmatpush1.msra.mxu0 %v1021
        %1051 = vmatprep.subr.mxu0 %v1025
        %1052 = vmatpush1.msra.mxu0 %v1024
        %1053 = vmatprep.subr.mxu0 %v1028
        %1054 = vmatpush1.msra.mxu0 %v1027
        %1055 = vmatprep.subr.mxu0 %v1042
        %1056 = vmatpush1.msra.mxu0 %v1040
        %1057 = vmatprep.subr.mxu0 0.0
        %1058 = vmatpush1.msra.mxu0 0.0
        %1059 = vmatprep.subr.mxu0 0.0
        %1060 = vmatpush1.msra.mxu0 0.0
        %1061 = vmatprep.subr.mxu0 0.0
        %1062 = vmatpush1.msra.mxu0 0.0
        %1063 = vmatprep.subr.mxu0 0.0
        %1064 = vmatpush1.msra.mxu0 0.0
        %1065 = vmatprep.subr.mxu0 0.0
        %1066 = vmatpush1.msra.mxu0 0.0
        %1067 = vmatprep.subr.mxu0 0.0
        %1068 = vmatpush1.msra.mxu0 0.0
        %1069 = vmatprep.subr.mxu0 0.0
        %1070 = vmatpush1.msra.mxu0 0.0
        %1071 = vmatprep.subr.mxu0 0.0
        %1072 = vmatpush1.msra.mxu0 0.0
        %1073 = vmatprep.subr.mxu0 0.0
        %1074 = vmatpush1.msra.mxu0 0.0
        %1075 = vmatprep.subr.mxu0 0.0
        %1076 = vmatpush1.msra.mxu0 0.0
        %1077 = vmatprep.subr.mxu0 0.0
        %1078 = vmatpush1.msra.mxu0 0.0
        %1079 = vmatprep.subr.mxu0 0.0
        %1080 = vmatpush1.msra.mxu0 0.0
        %1081 = vmatprep.subr.mxu0 0.0
        %1082 = vmatpush1.msra.mxu0 0.0
        %1083 = vmatprep.subr.mxu0 0.0
        %1084 = vmatpush1.msra.mxu0 0.0
        %1085 = vmatprep.subr.mxu0 0.0
        %1086 = vmatpush1.msra.mxu0 0.0
        %1087 = vmatprep.subr.mxu0 0.0
        %1088 = vmatpush1.msra.mxu0 0.0
        %1089 = vmatprep.subr.mxu0 0.0
        %1090 = vmatpush1.msra.mxu0 0.0
        %1091 = vmatprep.subr.mxu0 0.0
        %1092 = vmatpush1.msra.mxu0 0.0
        %1093 = vmatprep.subr.mxu0 0.0
        %1094 = vmatpush1.msra.mxu0 0.0
        %1095 = vmatprep.subr.mxu0 0.0
        %1096 = vmatpush1.msra.mxu0 0.0
        %1097 = vmatprep.subr.mxu0 0.0
        %1098 = vmatpush1.msra.mxu0 0.0
        %1099 = vmatprep.subr.mxu0 0.0
        %1100 = vmatpush1.msra.mxu0 0.0
        %1101 = vmatprep.subr.mxu0 0.0
        %1102 = vmatpush1.msra.mxu0 0.0
        %1103 = vmatprep.subr.mxu0 0.0
        %1104 = vmatpush1.msra.mxu0 0.0
        %1105 = vmatprep.subr.mxu0 0.0
        %1106 = vmatpush1.msra.mxu0 0.0
        %1107 = vmatprep.subr.mxu0 0.0
        %1108 = vmatpush1.msra.mxu0 0.0
        %1109 = vmatprep.subr.mxu0 0.0
        %1110 = vmatpush1.msra.mxu0 0.0
        %1111 = vmatprep.mubr.f32.mxu0 0.0
        %1112 = vmatmul.mubr.f32.gmra.mrb[0].mxu0 %v1038
        %v1113 = vpop.f32.mrb[0].mxu0
        %v1114 = vadd.f32 %v1035, %v1113
        %v1115 = vpop.f32.mrb[0].mxu0
        %v1116 = vadd.f32 %v1035, %v1115
        %1117 = vdwg.mxu0
        %1118 = vmatprep.subr.mxu0 0.0
        %1119 = vmatpush1.msra.mxu0 %v1020
        %1120 = vmatprep.subr.mxu0 0.0
        %1121 = vmatpush1.msra.mxu0 %v1023
        %1122 = vmatprep.subr.mxu0 0.0
        %1123 = vmatpush1.msra.mxu0 %v1026
        %1124 = vmatprep.subr.mxu0 0.0
        %1125 = vmatpush1.msra.mxu0 %v1029
        %1126 = vmatprep.subr.mxu0 0.0
        %1127 = vmatpush1.msra.mxu0 %v1045
        %1128 = vmatprep.subr.mxu0 0.0
        %1129 = vmatpush1.msra.mxu0 0.0
        %1130 = vmatprep.subr.mxu0 0.0
        %1131 = vmatpush1.msra.mxu0 0.0
        %1132 = vmatprep.subr.mxu0 0.0
        %1133 = vmatpush1.msra.mxu0 0.0
        %1134 = vmatprep.subr.mxu0 0.0
        %1135 = vmatpush1.msra.mxu0 0.0
        %1136 = vmatprep.subr.mxu0 0.0
        %1137 = vmatpush1.msra.mxu0 0.0
        %1138 = vmatprep.subr.mxu0 0.0
        %1139 = vmatpush1.msra.mxu0 0.0
        %1140 = vmatprep.subr.mxu0 0.0
        %1141 = vmatpush1.msra.mxu0 0.0
        %1142 = vmatprep.subr.mxu0 0.0
        %1143 = vmatpush1.msra.mxu0 0.0
        %1144 = vmatprep.subr.mxu0 0.0
        %1145 = vmatpush1.msra.mxu0 0.0
        %1146 = vmatprep.subr.mxu0 0.0
        %1147 = vmatpush1.msra.mxu0 0.0
        %1148 = vmatprep.subr.mxu0 0.0
        %1149 = vmatpush1.msra.mxu0 0.0
        %1150 = vmatprep.subr.mxu0 0.0
        %1151 = vmatpush1.msra.mxu0 0.0
        %1152 = vmatprep.subr.mxu0 0.0
        %1153 = vmatpush1.msra.mxu0 0.0
        %1154 = vmatprep.subr.mxu0 0.0
        %1155 = vmatpush1.msra.mxu0 0.0
        %1156 = vmatprep.subr.mxu0 0.0
        %1157 = vmatpush1.msra.mxu0 0.0
        %1158 = vmatprep.subr.mxu0 0.0
        %1159 = vmatpush1.msra.mxu0 0.0
        %1160 = vmatprep.subr.mxu0 0.0
        %1161 = vmatpush1.msra.mxu0 0.0
        %1162 = vmatprep.subr.mxu0 0.0
        %1163 = vmatpush1.msra.mxu0 0.0
        %1164 = vmatprep.subr.mxu0 0.0
        %1165 = vmatpush1.msra.mxu0 0.0
        %1166 = vmatprep.subr.mxu0 0.0
        %1167 = vmatpush1.msra.mxu0 0.0
        %1168 = vmatprep.subr.mxu0 0.0
        %1169 = vmatpush1.msra.mxu0 0.0
        %1170 = vmatprep.subr.mxu0 0.0
        %1171 = vmatpush1.msra.mxu0 0.0
        %1172 = vmatprep.subr.mxu0 0.0
        %1173 = vmatpush1.msra.mxu0 0.0
        %1174 = vmatprep.subr.mxu0 0.0
        %1175 = vmatpush1.msra.mxu0 0.0
        %1176 = vmatprep.subr.mxu0 0.0
        %1177 = vmatpush1.msra.mxu0 0.0
        %1178 = vmatprep.subr.mxu0 0.0
        %1179 = vmatpush1.msra.mxu0 0.0
        %1180 = vmatprep.subr.mxu0 0.0
        %1181 = vmatpush1.msra.mxu0 0.0
        %1182 = vmatprep.mubr.f32.mxu0 0.0
        %1183 = vmatmul.mubr.f32.gmra.mrb[0].mxu0 %v1038
        %v1184 = vpop.f32.mrb[0].mxu0
        %v1185 = vadd.f32 %v1035, %v1184
        %v1186 = vpop.f32.mrb[0].mxu0
        %1187 = vdwg.mxu0
        %v1188 = vsel %vm520, %v1114, 0.0
        %v1189 = vrot.slane %v1188, 4
        %v1190 = vadd.f32 %v1188, %v1189
        %v1191 = vrot.slane %v1190, 2
        %v1192 = vadd.f32 %v1190, %v1191
        %v1193 = vrot.slane %v1192, 1
        %v1194 = vadd.f32 %v1192, %v1193
        %v1195 = vsel %vm520, %v1116, 0.0
        %v1196 = vrot.slane %v1195, 4
        %v1197 = vadd.f32 %v1195, %v1196
        %v1198 = vrot.slane %v1197, 2
        %v1199 = vadd.f32 %v1197, %v1198
        %v1200 = vrot.slane %v1199, 1
        %v1201 = vadd.f32 %v1199, %v1200
        %v1202 = vsel %vm520, %v1185, 0.0
        %v1203 = vrot.slane %v1202, 4
        %v1204 = vadd.f32 %v1202, %v1203
        %v1205 = vrot.slane %v1204, 2
        %v1206 = vadd.f32 %v1204, %v1205
        %v1207 = vrot.slane %v1206, 1
        %v1208 = vadd.f32 %v1206, %v1207
        %v1209 = vmul.f32 %v1194, 0.25
        %v1210 = vmul.f32 %v1201, 0.25
        %v1211 = vmul.f32 %v1208, 0.25
        %v1212 = vsub.f32 %v1114, %v1209
        %v1213 = vsub.f32 %v1116, %v1210
        %v1214 = vsub.f32 %v1185, %v1211
        %v1215 = vmul.f32 %v1212, %v1212
        %v1216 = vmul.f32 %v1213, %v1213
        %v1217 = vmul.f32 %v1214, %v1214
        %v1218 = vsel %vm520, %v1215, 0.0
        %v1219 = vrot.slane %v1218, 4
        %v1220 = vadd.f32 %v1218, %v1219
        %v1221 = vrot.slane %v1220, 2
        %v1222 = vadd.f32 %v1220, %v1221
        %v1223 = vrot.slane %v1222, 1
        %v1224 = vadd.f32 %v1222, %v1223
        %v1225 = vsel %vm520, %v1216, 0.0
        %v1226 = vrot.slane %v1225, 4
        %v1227 = vadd.f32 %v1225, %v1226
        %v1228 = vrot.slane %v1227, 2
        %v1229 = vadd.f32 %v1227, %v1228
        %v1230 = vrot.slane %v1229, 1
        %v1231 = vadd.f32 %v1229, %v1230
        %v1232 = vsel %vm520, %v1217, 0.0
        %v1233 = vrot.slane %v1232, 4
        %v1234 = vadd.f32 %v1232, %v1233
        %v1235 = vrot.slane %v1234, 2
        %v1236 = vadd.f32 %v1234, %v1235
        %v1237 = vrot.slane %v1236, 1
        %v1238 = vadd.f32 %v1236, %v1237
        %v1239 = vmul.f32 %v1224, 0.33333334
        %v1240 = vmul.f32 %v1231, 0.33333334
        %v1241 = vmul.f32 %v1238, 0.33333334
        %v1242 = vld [vmem:[%s8] sm:$0xf]
        %1244 = vset.pattern.permute.xlu0 0
        %1245 = vperm.xlu0 %1244, %v1242
        %v1246 = vpop.permute.xlu0 %1245
        %v1248 = vmul.f32 %v1246, %v1212
        %v1249 = vmul.f32 %v1246, %v1213
        %v1250 = vmul.f32 %v1246, %v1214
        %v1251 = vadd.f32 %v1239, 0.001
        %v1252 = vadd.f32 %v1240, 0.001
        %v1253 = vadd.f32 %v1241, 0.001
        %v1254 = vrsqrt.pop %v1251
        %v1255 = vrsqrt.pop %v1252
        %v1256 = vrsqrt.pop %v1253
        %v1257 = vmul.f32 %v1248, %v1254
        %v1258 = vmul.f32 %v1249, %v1255
        %v1259 = vmul.f32 %v1250, %v1256
        %v1260 = vld [vmem:[%s9] sm:$0xf]
        %1262 = vset.pattern.permute.xlu0 0
        %1263 = vperm.xlu0 %1262, %v1260
        %v1264 = vpop.permute.xlu0 %1263
        %v1266 = vadd.f32 %v1257, %v1264
        %v1267 = vadd.f32 %v1258, %v1264
        %v1268 = vadd.f32 %v1259, %v1264
        %v1269 = vadd.f32 %v1266, %v371
        %v1270 = vadd.f32 %v1267, %v391
        %v1271 = vadd.f32 %v1268, %v372
        %v1274 = vcombine.low %v1269, %v1270
        %1276 = vst [vmem:[%s365] sm:$0xff] %v1274
        %1277 = vst [vmem:[%s365 + $0x8] sm:$0xf] %v1271
        %s1278 = sand.u32 %s248, 1
        %s1279 = scalar_lea.sflag [#allocation4], %s1278
        %s1280 = sand.u32 %s248, 1
        %s1281 = smul.addr %s1280, 12
        %s1282 = scalar_lea.vmem [#allocation5], %s1281
        // Predicated region
        $region65: #{tpu_custom_call.1} parent=59 // pred_check
          %p1283 = pneg %p258
        $region66: #{tpu_custom_call.1} parent=59 // pred_check_branch
          %1285 = sbr.rel (%p1283) target = $region68
        $region67: #{tpu_custom_call.1} parent=59 // pred_region
          %s1287 = ssub.s32 192, 192
          %1288 = vsyncadd %s1279, %s1287
          %s1289 = smul.addr %s25, 3
          %s1290 = smul.addr %s1289, 64
          %s1291 = scalar_lea.hbm %s10, %s1290
          %s1293 = sshll.u32 %s1282, 4
          %s1294 = int_to_ptr.vmem [resolvable:$true] %s1293
          %1296 = dma.vmem_to_hbm [thread:$0]  %s1294, 192, %s1291, %s1279
        $region68: #{tpu_custom_call.1} parent=59 // pred_fallthru
          _
      $region60: #{tpu_custom_call.1} parent=5 // pred_fallthru
        _
      %p1297 = scmp.le.s32.totalorder 2, %s20
      // Predicated region
      $region69: #{tpu_custom_call.1} parent=5 // pred_check
        %p1298 = pneg %p1297
      $region70: #{tpu_custom_call.1} parent=5 // pred_check_branch
        %1300 = sbr.rel (%p1298) target = $region72
      $region71: #{tpu_custom_call.1} parent=5 // pred_region
        %s1301 = ssub.s32 %s20, 2
        // Predicated region
        $region73: #{tpu_custom_call.1} parent=71 // pred_check
          %p1302 = pneg %p264
        $region74: #{tpu_custom_call.1} parent=71 // pred_check_branch
          %1304 = sbr.rel (%p1302) target = $region76
        $region75: #{tpu_custom_call.1} parent=71 // pred_region
          %s1305 = sand.u32 %s249, 1
          %s1306 = scalar_lea.sflag [#allocation4], %s1305
          %s1307 = sand.u32 %s249, 1
          %s1308 = smul.addr %s1307, 12
          %s1309 = scalar_lea.vmem [#allocation5], %s1308
          %1310 = dma.done %s1306, 192
        $region76: #{tpu_custom_call.1} parent=71 // pred_fallthru
          _
      $region72: #{tpu_custom_call.1} parent=5 // pred_fallthru
        _
    $region6: #{tpu_custom_call.1} parent=1 // loop_footer
      %s24 = sadd.s32 1, %s20
    $region7: #{tpu_custom_call.1} parent=1 // loop_footer_branch
      %19 = sbr.rel target = $region3
    $region8: #{tpu_custom_call.1} parent=1 // loop_exit
      _
    %1311 = vsyncpa [#allocation3], 1
    %s1312 = scalar_lea.sflag [#allocation3], 1
    %1313 = vsyncpa %s1312, 1
    %1314 = vsyncpa [#allocation4], 1
    %s1315 = scalar_lea.sflag [#allocation4], 1
    %1316 = vsyncpa %s1315, 1

</llo_original>
